<compile_context>
chip_gen: v5e
topology: v5e:2x2
jax: 0.10.0
libtpu: 0.0.40
codegen_flags: <defaults>
</compile_context>

<pallas_src>
import jax
import jax.numpy as jnp
import numpy as np
from jax import lax
from jax.experimental import pallas as pl
from jax.experimental.pallas import tpu as pltpu


# ----------------------------- host-side helpers ----------------------------

def _flatten_conv_w(w):
    """(O, I, kh, kw) -> (O, kh*kw*I), tap-major columns (tap = ky*kw + kx)."""
    O, I, kh, kw = w.shape
    return jnp.transpose(w, (0, 2, 3, 1)).reshape(O, kh * kw * I)


def _round_up(x, m):
    return ((x + m - 1) // m) * m


# --------------------------------- forward ----------------------------------

def edge_enhance_forward(fea, edge, params):
    """EdgeEnhance.forward(fea, edge) as a single fused Pallas TPU kernel."""
    B, nf, H, W = fea.shape
    hid = params["w_fc1"].shape[0]
    Wp = W + 2                                   # padded row width (1 zero col each side)
    SP = H * Wp                                  # flattened strip length
    base = max(128, _round_up(Wp + 1, 128))      # lane-aligned interior start
    PP = base + SP + base                        # padded flat length (zero margins)
    inv_hw = 1.0 / float(H * W)

    offs_e = (-Wp, -1, 0, 1, Wp)                                        # composed edge conv
    offs_9 = tuple(dy * Wp + dx for dy in (-1, 0, 1) for dx in (-1, 0, 1))  # 3x3

    # --- lane-dense activation layouts (pure data movement, ~1x traffic) ---
    fea_strip = jnp.pad(fea, ((0, 0), (0, 0), (0, 0), (1, 1))).reshape(B, nf, SP)
    fea_pad = jnp.pad(fea_strip, ((0, 0), (0, 0), (base, PP - base - SP)))
    edge_strip = jnp.pad(edge, ((0, 0), (0, 0), (0, 0), (1, 1))).reshape(B, nf, SP)

    col = np.arange(SP) % Wp
    mask = jnp.asarray(((col != 0) & (col != Wp - 1))
                       .astype(np.float32).reshape(1, SP))              # interior cols

    # --- host-side algebraic composition of the edge-detect branch ---
    A = params["w1_1"][:, :nf, 0, 0]             # (nf, nf) acting on conv3_1 output
    Bm = params["w1_1"][:, nf:, 0, 0]            # (nf, nf) acting on conv1_3 output
    w3 = params["w3_1"][:, :, :, 0]              # (nf, nf, 3) vertical taps
    w13 = params["w1_3"][:, :, 0, :]             # (nf, nf, 3) horizontal taps
    w_edge = jnp.concatenate(
        [A @ w3[:, :, 0],                        # shift -Wp
         Bm @ w13[:, :, 0],                      # shift -1
         A @ w3[:, :, 1] + Bm @ w13[:, :, 1],    # shift 0
         Bm @ w13[:, :, 2],                      # shift +1
         A @ w3[:, :, 2]], axis=1)               # shift +Wp   -> (nf, 5*nf)
    b_edge = A @ params["b3_1"] + Bm @ params["b1_3"] + params["b1_1"]

    wt0 = params["w_t0"][:, :, 0, 0]             # (nf, 2nf)
    wt1 = _flatten_conv_w(params["w_t1"])        # (nf, 9nf)
    wt2 = _flatten_conv_w(params["w_t2"])        # (nf, 9nf)
    wfc1_t = jnp.transpose(params["w_fc1"])      # (2nf, hid)
    wfc2 = params["w_fc2"]                       # (2nf, hid)

    # --- pack all weights/biases into two lane-dense slabs (few fat DMAs) ---
    CW = _round_up(max(9 * nf, 5 * nf, 2 * nf, hid), 128)
    RW = _round_up(8 * nf + 1, 8)
    r_we, r_t0, r_t1, r_t2 = 0, nf, 2 * nf, 3 * nf
    r_fc1, r_fc2, r_bfc1 = 4 * nf, 6 * nf, 8 * nf
    w_slab = jnp.zeros((RW, CW), jnp.float32)
    w_slab = w_slab.at[r_we:r_we + nf, :5 * nf].set(w_edge)
    w_slab = w_slab.at[r_t0:r_t0 + nf, :2 * nf].set(wt0)
    w_slab = w_slab.at[r_t1:r_t1 + nf, :9 * nf].set(wt1)
    w_slab = w_slab.at[r_t2:r_t2 + nf, :9 * nf].set(wt2)
    w_slab = w_slab.at[r_fc1:r_fc1 + 2 * nf, :hid].set(wfc1_t)
    w_slab = w_slab.at[r_fc2:r_fc2 + 2 * nf, :hid].set(wfc2)
    w_slab = w_slab.at[r_bfc1:r_bfc1 + 1, :hid].set(params["b_fc1"].reshape(1, hid))

    RB = max(2 * nf, 8)
    b_slab = jnp.zeros((RB, 128), jnp.float32)
    b_slab = b_slab.at[:nf, 0].set(b_edge)
    b_slab = b_slab.at[:nf, 1].set(params["b_t0"])
    b_slab = b_slab.at[:nf, 2].set(params["b_t1"])
    b_slab = b_slab.at[:nf, 3].set(params["b_t2"])
    b_slab = b_slab.at[:2 * nf, 4].set(params["b_fc2"])

    def kernel(fea_ref, edge_ref, mask_ref, w_ref, b_ref, out_ref, pad_ref):
        # Zero only the scratch margins; the interior is fully overwritten below.
        pad_ref[:, :base] = jnp.zeros((nf, base), jnp.float32)
        pad_ref[:, base + SP:] = jnp.zeros((nf, base), jnp.float32)

        mask_row = mask_ref[...]                                     # (1, SP)

        def tap_stack(src_ref, offsets):
            # Shifted views stacked along K -> one wide MXU contraction.
            return jnp.concatenate(
                [src_ref[:, base + s: base + s + SP] for s in offsets], axis=0)

        # --- composed edge branch: one (nf, 5nf) x (5nf, SP) dot ---
        fea_edge = (jnp.dot(w_ref[r_we:r_we + nf, :5 * nf],
                            tap_stack(fea_ref, offs_e),
                            preferred_element_type=jnp.float32)
                    + b_ref[:nf, 0:1]) * mask_row
        edge_v = edge_ref[...]                                       # pad cols already 0
        fused = jnp.concatenate([fea_edge, edge_v], axis=0)          # (2nf, SP)

        # --- channel attention: global avg / max pool + tiny shared MLP ---
        avg_p = jnp.sum(fused, axis=-1, keepdims=True) * inv_hw      # (2nf, 1)
        max_p = jnp.max(jnp.where(mask_row > 0.0, fused, jnp.float32(-jnp.inf)),
                        axis=-1, keepdims=True)                      # (2nf, 1)
        wfc1_t_v = w_ref[r_fc1:r_fc1 + 2 * nf, :hid]
        wfc2_v = w_ref[r_fc2:r_fc2 + 2 * nf, :hid]
        bfc1_v = w_ref[r_bfc1:r_bfc1 + 1, :hid]
        bfc2_v = b_ref[:2 * nf, 4:5]

        def mlp(p):                                                  # p: (2nf, 1)
            h = jnp.maximum(
                jnp.sum(wfc1_t_v * p, axis=0, keepdims=True) + bfc1_v, 0.0)   # (1, hid)
            return jnp.sum(wfc2_v * h, axis=1, keepdims=True) + bfc2_v        # (2nf, 1)

        gamma = mlp(avg_p) + mlp(max_p)                              # (2nf, 1)

        # --- fold gamma into the tail 1x1 weights (exact; no (nf,SP) scaling) ---
        ri = lax.broadcasted_iota(jnp.int32, (2 * nf, 2 * nf), 0)
        ci = lax.broadcasted_iota(jnp.int32, (2 * nf, 2 * nf), 1)
        diag_g = jnp.where(ri == ci, gamma, 0.0)                     # diag(gamma)
        wt0_scaled = jnp.dot(w_ref[r_t0:r_t0 + nf, :2 * nf], diag_g,
                             preferred_element_type=jnp.float32)     # (nf, 2nf)

        # --- conv_tail: 1x1 -> 3x3 -> ReLU -> 3x3, then residual ---
        t0 = jnp.dot(wt0_scaled, fused,
                     preferred_element_type=jnp.float32) + b_ref[:nf, 1:2]
        pad_ref[:, base:base + SP] = t0 * mask_row
        t1 = jnp.maximum(
            jnp.dot(w_ref[r_t1:r_t1 + nf, :9 * nf], tap_stack(pad_ref, offs_9),
                    preferred_element_type=jnp.float32) + b_ref[:nf, 2:3], 0.0)
        pad_ref[:, base:base + SP] = t1 * mask_row
        t2 = jnp.dot(w_ref[r_t2:r_t2 + nf, :9 * nf], tap_stack(pad_ref, offs_9),
                     preferred_element_type=jnp.float32) + b_ref[:nf, 3:4]

        out_ref[...] = t2 + fea_ref[:, base:base + SP]               # residual

    # VMEM budget derived from actual tile bytes (double-buffered I/O + scratch +
    # in-kernel temporaries) with headroom, instead of a hard-coded limit.
    f32 = 4
    in_bytes = f32 * (nf * PP + nf * SP + SP + RW * CW + RB * 128)
    out_bytes = f32 * nf * SP
    tmp_bytes = f32 * SP * (9 * nf + 2 * nf + 4 * nf)
    vmem_limit = int(min(max(2 * (in_bytes + out_bytes) + f32 * nf * PP
                             + tmp_bytes + (2 << 20), 4 << 20), 100 << 20))

    const2d = lambda shape: pl.BlockSpec(shape, lambda b: (0, 0))
    out_strip = pl.pallas_call(
        kernel,
        out_shape=jax.ShapeDtypeStruct((B, nf, SP), jnp.float32),
        grid=(B,),
        in_specs=[
            pl.BlockSpec((None, nf, PP), lambda b: (b, 0, 0)),       # fea (padded)
            pl.BlockSpec((None, nf, SP), lambda b: (b, 0, 0)),       # edge (strip)
            const2d((1, SP)),                                        # interior-col mask
            const2d((RW, CW)),                                       # packed weights
            const2d((RB, 128)),                                      # packed biases
        ],
        out_specs=pl.BlockSpec((None, nf, SP), lambda b: (b, 0, 0)),
        scratch_shapes=[pltpu.VMEM((nf, PP), jnp.float32)],
        compiler_params=pltpu.CompilerParams(
            dimension_semantics=("parallel",),
            vmem_limit_bytes=vmem_limit),
    )(fea_pad, edge_strip, mask, w_slab, b_slab)

    # crop away the zero pad columns (pure layout, ~1x traffic)
    return out_strip.reshape(B, nf, H, Wp)[:, :, :, 1:W + 1]


# ------------------------- pure-JAX reference (check) ------------------------

def _conv_ref(x, w, b, pad_hw):
    y = lax.conv_general_dilated(
        x, w, (1, 1), ((pad_hw[0], pad_hw[0]), (pad_hw[1], pad_hw[1])),
        dimension_numbers=("NCHW", "OIHW", "NCHW"))
    return y + b[None, :, None, None]


def edge_enhance_reference(fea, edge, params):
    fea_ver = _conv_ref(fea, params["w3_1"], params["b3_1"], (1, 0))
    fea_hor = _conv_ref(fea, params["w1_3"], params["b1_3"], (0, 1))
    fea_edge = _conv_ref(jnp.concatenate([fea_ver, fea_hor], axis=1),
                         params["w1_1"], params["b1_1"], (0, 0))
    fused = jnp.concatenate([fea_edge, edge], axis=1)
    avg = jnp.mean(fused, axis=(2, 3))
    mx = jnp.max(fused, axis=(2, 3))

    def mlp(p):
        h = jax.nn.relu(p @ params["w_fc1"].T + params["b_fc1"])
        return h @ params["w_fc2"].T + params["b_fc2"]

    gamma = mlp(avg) + mlp(mx)
    fused = fused * gamma[:, :, None, None]
    t0 = _conv_ref(fused, params["w_t0"], params["b_t0"], (0, 0))
    t1 = jax.nn.relu(_conv_ref(t0, params["w_t1"], params["b_t1"], (1, 1)))
    t2 = _conv_ref(t1, params["w_t2"], params["b_t2"], (1, 1))
    return t2 + fea


# ----------------------------------- main ------------------------------------

if __name__ == "__main__":
    key = jax.random.PRNGKey(0)
    # nf=8 keeps the channel-attention bottleneck Linear(2*nf, 2*nf//16)
    # non-degenerate (hidden=1) and fills the 8-sublane vreg groups.
    B, nf, H, W = 2, 8, 16, 16
    hid = (2 * nf) // 16
    ks = jax.random.split(key, 20)

    fea = jax.random.normal(ks[0], (B, nf, H, W), jnp.float32)
    edge = jax.random.normal(ks[1], (B, nf, H, W), jnp.float32)

    params = dict(
        w3_1=0.2 * jax.random.normal(ks[2], (nf, nf, 3, 1), jnp.float32),
        b3_1=0.1 * jax.random.normal(ks[3], (nf,), jnp.float32),
        w1_3=0.2 * jax.random.normal(ks[4], (nf, nf, 1, 3), jnp.float32),
        b1_3=0.1 * jax.random.normal(ks[5], (nf,), jnp.float32),
        w1_1=0.2 * jax.random.normal(ks[6], (nf, 2 * nf, 1, 1), jnp.float32),
        b1_1=0.1 * jax.random.normal(ks[7], (nf,), jnp.float32),
        w_fc1=0.2 * jax.random.normal(ks[8], (hid, 2 * nf), jnp.float32),
        b_fc1=0.1 * jax.random.normal(ks[9], (hid,), jnp.float32),
        w_fc2=0.2 * jax.random.normal(ks[10], (2 * nf, hid), jnp.float32),
        b_fc2=0.1 * jax.random.normal(ks[11], (2 * nf,), jnp.float32),
        w_t0=0.2 * jax.random.normal(ks[12], (nf, 2 * nf, 1, 1), jnp.float32),
        b_t0=0.1 * jax.random.normal(ks[13], (nf,), jnp.float32),
        w_t1=0.2 * jax.random.normal(ks[14], (nf, nf, 3, 3), jnp.float32),
        b_t1=0.1 * jax.random.normal(ks[15], (nf,), jnp.float32),
        w_t2=0.2 * jax.random.normal(ks[16], (nf, nf, 3, 3), jnp.float32),
        b_t2=0.1 * jax.random.normal(ks[17], (nf,), jnp.float32),
    )

    out = jax.block_until_ready(edge_enhance_forward(fea, edge, params))
    expected = edge_enhance_reference(fea, edge, params)
    np.testing.assert_allclose(np.asarray(out), np.asarray(expected),
                               rtol=1e-4, atol=1e-4)
    print("KERNEL_OK")
</pallas_src>

<mosaic_0001>
module attributes {stable_mosaic.version = 11 : i64} {
  func.func @kernel(%arg0: i32, %arg1: memref<1x8x544xf32, #tpu.memory_space<vmem>>, %arg2: memref<1x8x288xf32, #tpu.memory_space<vmem>>, %arg3: memref<1x288xf32, #tpu.memory_space<vmem>>, %arg4: memref<72x128xf32, #tpu.memory_space<vmem>>, %arg5: memref<16x128xf32, #tpu.memory_space<vmem>>, %arg6: memref<1x8x288xf32, #tpu.memory_space<vmem>>, %arg7: memref<8x544xf32, #tpu.memory_space<vmem>>) attributes {dimension_semantics = [#tpu.dimension_semantics<parallel>], iteration_bounds = array<i64: 2>, scalar_prefetch = 0 : i64, scratch_operands = 1 : i64, tpu.core_type = #tpu.core_type<tc>, window_params = [{transform_indices = @transform_0, window_bounds = array<i64: 1, 8, 544>}, {transform_indices = @transform_1, window_bounds = array<i64: 1, 8, 288>}, {pipeline_mode = #tpu.pipeline_mode<synchronous>, transform_indices = @transform_2, window_bounds = array<i64: 1, 288>}, {pipeline_mode = #tpu.pipeline_mode<synchronous>, transform_indices = @transform_3, window_bounds = array<i64: 72, 128>}, {pipeline_mode = #tpu.pipeline_mode<synchronous>, transform_indices = @transform_4, window_bounds = array<i64: 16, 128>}, {transform_indices = @transform_5, window_bounds = array<i64: 1, 8, 288>}]} {
    %cst = arith.constant 0.000000e+00 : f32
    %0 = vector.broadcast %cst : f32 to vector<8x128xf32>
    %c0 = arith.constant 0 : index
    %c0_0 = arith.constant 0 : index
    %1 = vector.load %arg7[%c0, %c0_0] : memref<8x544xf32, #tpu.memory_space<vmem>>, vector<8x128xf32>
    tpu.vector_store %arg7[%c0, %c0_0], %0 {strides = array<i32>} : memref<8x544xf32, #tpu.memory_space<vmem>>, vector<8x128xf32>,
    %cst_1 = arith.constant 0.000000e+00 : f32
    %2 = vector.broadcast %cst_1 : f32 to vector<8x128xf32>
    %c0_2 = arith.constant 0 : index
    %c416 = arith.constant 416 : index
    %3 = vector.load %arg7[%c0_2, %c416] : memref<8x544xf32, #tpu.memory_space<vmem>>, vector<8x128xf32>
    tpu.vector_store %arg7[%c0_2, %c416], %2 {strides = array<i32>} : memref<8x544xf32, #tpu.memory_space<vmem>>, vector<8x128xf32>,
    %c0_3 = arith.constant 0 : index
    %c0_4 = arith.constant 0 : index
    %4 = vector.load %arg3[%c0_3, %c0_4] : memref<1x288xf32, #tpu.memory_space<vmem>>, vector<1x288xf32>
    %c0_5 = arith.constant 0 : index
    %c0_6 = arith.constant 0 : index
    %5 = vector.load %arg4[%c0_5, %c0_6] : memref<72x128xf32, #tpu.memory_space<vmem>>, vector<8x40xf32>
    %c0_7 = arith.constant 0 : index
    %c0_8 = arith.constant 0 : index
    %c110 = arith.constant 110 : index
    %6 = vector.load %arg1[%c0_7, %c0_8, %c110] : memref<1x8x544xf32, #tpu.memory_space<vmem>>, vector<1x8x288xf32>
    %7 = vector.shape_cast %6 : vector<1x8x288xf32> to vector<8x288xf32>
    %c0_9 = arith.constant 0 : index
    %c0_10 = arith.constant 0 : index
    %c127 = arith.constant 127 : index
    %8 = vector.load %arg1[%c0_9, %c0_10, %c127] : memref<1x8x544xf32, #tpu.memory_space<vmem>>, vector<1x8x288xf32>
    %9 = vector.shape_cast %8 : vector<1x8x288xf32> to vector<8x288xf32>
    %c0_11 = arith.constant 0 : index
    %c0_12 = arith.constant 0 : index
    %c128 = arith.constant 128 : index
    %10 = vector.load %arg1[%c0_11, %c0_12, %c128] : memref<1x8x544xf32, #tpu.memory_space<vmem>>, vector<1x8x288xf32>
    %11 = vector.shape_cast %10 : vector<1x8x288xf32> to vector<8x288xf32>
    %c0_13 = arith.constant 0 : index
    %c0_14 = arith.constant 0 : index
    %c129 = arith.constant 129 : index
    %12 = vector.load %arg1[%c0_13, %c0_14, %c129] : memref<1x8x544xf32, #tpu.memory_space<vmem>>, vector<1x8x288xf32>
    %13 = vector.shape_cast %12 : vector<1x8x288xf32> to vector<8x288xf32>
    %c0_15 = arith.constant 0 : index
    %c0_16 = arith.constant 0 : index
    %c146 = arith.constant 146 : index
    %14 = vector.load %arg1[%c0_15, %c0_16, %c146] : memref<1x8x544xf32, #tpu.memory_space<vmem>>, vector<1x8x288xf32>
    %15 = vector.shape_cast %14 : vector<1x8x288xf32> to vector<8x288xf32>
    %16 = tpu.concatenate %7, %9, %11, %13, %15 in 0 : vector<8x288xf32>, vector<8x288xf32>, vector<8x288xf32>, vector<8x288xf32>, vector<8x288xf32> -> vector<40x288xf32>
    %cst_17 = arith.constant dense<0.000000e+00> : vector<8x288xf32>
    %17 = tpu.matmul %5, %16, %cst_17 {dimension_numbers = #tpu.dot_dimension_numbers<[1], [0], [0], [1], [0, 0, 1, 1], [], []>} : vector<8x40xf32>, vector<40x288xf32>, vector<8x288xf32> -> vector<8x288xf32>
    %c0_18 = arith.constant 0 : index
    %c0_19 = arith.constant 0 : index
    %18 = vector.load %arg5[%c0_18, %c0_19] : memref<16x128xf32, #tpu.memory_space<vmem>>, vector<8x1xf32>
    %19 = vector.broadcast %18 : vector<8x1xf32> to vector<8x288xf32>
    %20 = arith.addf %17, %19 : vector<8x288xf32>
    %21 = vector.broadcast %4 : vector<1x288xf32> to vector<8x288xf32>
    %22 = arith.mulf %20, %21 : vector<8x288xf32>
    %c0_20 = arith.constant 0 : index
    %c0_21 = arith.constant 0 : index
    %c0_22 = arith.constant 0 : index
    %23 = vector.load %arg2[%c0_20, %c0_21, %c0_22] : memref<1x8x288xf32, #tpu.memory_space<vmem>>, vector<1x8x288xf32>
    %24 = vector.shape_cast %23 : vector<1x8x288xf32> to vector<8x288xf32>
    %25 = tpu.concatenate %22, %24 in 0 : vector<8x288xf32>, vector<8x288xf32> -> vector<16x288xf32>
    %cst_23 = arith.constant dense<0.000000e+00> : vector<16xf32>
    %26 = vector.multi_reduction <add>, %25, %cst_23 [1] : vector<16x288xf32> to vector<16xf32>
    %27 = vector.shape_cast %26 : vector<16xf32> to vector<16x1xf32>
    %cst_24 = arith.constant 3.906250e-03 : f32
    %28 = vector.broadcast %cst_24 : f32 to vector<16x1xf32>
    %29 = arith.mulf %27, %28 : vector<16x1xf32>
    %cst_25 = arith.constant 0.000000e+00 : f32
    %30 = vector.broadcast %cst_25 : f32 to vector<1x288xf32>
    %31 = arith.cmpf ogt, %4, %30 : vector<1x288xf32>
    %cst_26 = arith.constant 0xFF800000 : f32
    %32 = vector.shape_cast %31 : vector<1x288xi1> to vector<1x288xi1>
    %33 = vector.broadcast %32 : vector<1x288xi1> to vector<16x288xi1>
    %34 = vector.broadcast %cst_26 : f32 to vector<16x288xf32>
    %35 = arith.select %33, %25, %34 : vector<16x288xi1>, vector<16x288xf32>
    %cst_27 = arith.constant dense<0xFF800000> : vector<16xf32>
    %36 = vector.multi_reduction <maximumf>, %35, %cst_27 [1] : vector<16x288xf32> to vector<16xf32>
    %37 = vector.shape_cast %36 : vector<16xf32> to vector<16x1xf32>
    %c32 = arith.constant 32 : index
    %c0_28 = arith.constant 0 : index
    %38 = vector.load %arg4[%c32, %c0_28] : memref<72x128xf32, #tpu.memory_space<vmem>>, vector<16x1xf32>
    %c48 = arith.constant 48 : index
    %c0_29 = arith.constant 0 : index
    %39 = vector.load %arg4[%c48, %c0_29] : memref<72x128xf32, #tpu.memory_space<vmem>>, vector<16x1xf32>
    %c64 = arith.constant 64 : index
    %c0_30 = arith.constant 0 : index
    %40 = vector.load %arg4[%c64, %c0_30] : memref<72x128xf32, #tpu.memory_space<vmem>>, vector<1x1xf32>
    %c0_31 = arith.constant 0 : index
    %c4 = arith.constant 4 : index
    %41 = vector.load %arg5[%c0_31, %c4] : memref<16x128xf32, #tpu.memory_space<vmem>>, vector<16x1xf32>
    %42 = arith.mulf %38, %29 : vector<16x1xf32>
    %cst_32 = arith.constant dense<0.000000e+00> : vector<1xf32>
    %43 = vector.multi_reduction <add>, %42, %cst_32 [0] : vector<16x1xf32> to vector<1xf32>
    %44 = vector.shape_cast %43 : vector<1xf32> to vector<1x1xf32>
    %45 = arith.addf %44, %40 : vector<1x1xf32>
    %cst_33 = arith.constant 0.000000e+00 : f32
    %46 = vector.broadcast %cst_33 : f32 to vector<1x1xf32>
    %47 = arith.maximumf %45, %46 : vector<1x1xf32>
    %48 = vector.broadcast %47 : vector<1x1xf32> to vector<16x1xf32>
    %49 = arith.mulf %39, %48 : vector<16x1xf32>
    %cst_34 = arith.constant dense<0.000000e+00> : vector<16xf32>
    %50 = vector.multi_reduction <add>, %49, %cst_34 [1] : vector<16x1xf32> to vector<16xf32>
    %51 = vector.shape_cast %50 : vector<16xf32> to vector<16x1xf32>
    %52 = arith.addf %51, %41 : vector<16x1xf32>
    %53 = arith.mulf %38, %37 : vector<16x1xf32>
    %cst_35 = arith.constant dense<0.000000e+00> : vector<1xf32>
    %54 = vector.multi_reduction <add>, %53, %cst_35 [0] : vector<16x1xf32> to vector<1xf32>
    %55 = vector.shape_cast %54 : vector<1xf32> to vector<1x1xf32>
    %56 = arith.addf %55, %40 : vector<1x1xf32>
    %cst_36 = arith.constant 0.000000e+00 : f32
    %57 = vector.broadcast %cst_36 : f32 to vector<1x1xf32>
    %58 = arith.maximumf %56, %57 : vector<1x1xf32>
    %59 = vector.broadcast %58 : vector<1x1xf32> to vector<16x1xf32>
    %60 = arith.mulf %39, %59 : vector<16x1xf32>
    %cst_37 = arith.constant dense<0.000000e+00> : vector<16xf32>
    %61 = vector.multi_reduction <add>, %60, %cst_37 [1] : vector<16x1xf32> to vector<16xf32>
    %62 = vector.shape_cast %61 : vector<16xf32> to vector<16x1xf32>
    %63 = arith.addf %62, %41 : vector<16x1xf32>
    %64 = arith.addf %52, %63 : vector<16x1xf32>
    %65 = tpu.iota {dimensions = array<i32: 0>} : vector<16x16xi32>
    %66 = tpu.iota {dimensions = array<i32: 1>} : vector<16x16xi32>
    %67 = arith.cmpi eq, %65, %66 : vector<16x16xi32>
    %cst_38 = arith.constant 0.000000e+00 : f32
    %68 = vector.shape_cast %64 : vector<16x1xf32> to vector<16x1xf32>
    %69 = vector.broadcast %68 : vector<16x1xf32> to vector<16x16xf32>
    %70 = vector.broadcast %cst_38 : f32 to vector<16x16xf32>
    %71 = arith.select %67, %69, %70 : vector<16x16xi1>, vector<16x16xf32>
    %c8 = arith.constant 8 : index
    %c0_39 = arith.constant 0 : index
    %72 = vector.load %arg4[%c8, %c0_39] : memref<72x128xf32, #tpu.memory_space<vmem>>, vector<8x16xf32>
    %cst_40 = arith.constant dense<0.000000e+00> : vector<8x16xf32>
    %73 = tpu.matmul %72, %71, %cst_40 {dimension_numbers = #tpu.dot_dimension_numbers<[1], [0], [0], [1], [0, 0, 1, 1], [], []>} : vector<8x16xf32>, vector<16x16xf32>, vector<8x16xf32> -> vector<8x16xf32>
    %cst_41 = arith.constant dense<0.000000e+00> : vector<8x288xf32>
    %74 = tpu.matmul %73, %25, %cst_41 {dimension_numbers = #tpu.dot_dimension_numbers<[1], [0], [0], [1], [0, 0, 1, 1], [], []>} : vector<8x16xf32>, vector<16x288xf32>, vector<8x288xf32> -> vector<8x288xf32>
    %c0_42 = arith.constant 0 : index
    %c1 = arith.constant 1 : index
    %75 = vector.load %arg5[%c0_42, %c1] : memref<16x128xf32, #tpu.memory_space<vmem>>, vector<8x1xf32>
    %76 = vector.broadcast %75 : vector<8x1xf32> to vector<8x288xf32>
    %77 = arith.addf %74, %76 : vector<8x288xf32>
    %78 = vector.broadcast %4 : vector<1x288xf32> to vector<8x288xf32>
    %79 = arith.mulf %77, %78 : vector<8x288xf32>
    %c0_43 = arith.constant 0 : index
    %c128_44 = arith.constant 128 : index
    %80 = vector.load %arg7[%c0_43, %c128_44] : memref<8x544xf32, #tpu.memory_space<vmem>>, vector<8x288xf32>
    tpu.vector_store %arg7[%c0_43, %c128_44], %79 {strides = array<i32>} : memref<8x544xf32, #tpu.memory_space<vmem>>, vector<8x288xf32>,
    %c16 = arith.constant 16 : index
    %c0_45 = arith.constant 0 : index
    %81 = vector.load %arg4[%c16, %c0_45] : memref<72x128xf32, #tpu.memory_space<vmem>>, vector<8x72xf32>
    %c0_46 = arith.constant 0 : index
    %c109 = arith.constant 109 : index
    %82 = vector.load %arg7[%c0_46, %c109] : memref<8x544xf32, #tpu.memory_space<vmem>>, vector<8x288xf32>
    %c0_47 = arith.constant 0 : index
    %c110_48 = arith.constant 110 : index
    %83 = vector.load %arg7[%c0_47, %c110_48] : memref<8x544xf32, #tpu.memory_space<vmem>>, vector<8x288xf32>
    %c0_49 = arith.constant 0 : index
    %c111 = arith.constant 111 : index
    %84 = vector.load %arg7[%c0_49, %c111] : memref<8x544xf32, #tpu.memory_space<vmem>>, vector<8x288xf32>
    %c0_50 = arith.constant 0 : index
    %c127_51 = arith.constant 127 : index
    %85 = vector.load %arg7[%c0_50, %c127_51] : memref<8x544xf32, #tpu.memory_space<vmem>>, vector<8x288xf32>
    %c0_52 = arith.constant 0 : index
    %c128_53 = arith.constant 128 : index
    %86 = vector.load %arg7[%c0_52, %c128_53] : memref<8x544xf32, #tpu.memory_space<vmem>>, vector<8x288xf32>
    %c0_54 = arith.constant 0 : index
    %c129_55 = arith.constant 129 : index
    %87 = vector.load %arg7[%c0_54, %c129_55] : memref<8x544xf32, #tpu.memory_space<vmem>>, vector<8x288xf32>
    %c0_56 = arith.constant 0 : index
    %c145 = arith.constant 145 : index
    %88 = vector.load %arg7[%c0_56, %c145] : memref<8x544xf32, #tpu.memory_space<vmem>>, vector<8x288xf32>
    %c0_57 = arith.constant 0 : index
    %c146_58 = arith.constant 146 : index
    %89 = vector.load %arg7[%c0_57, %c146_58] : memref<8x544xf32, #tpu.memory_space<vmem>>, vector<8x288xf32>
    %c0_59 = arith.constant 0 : index
    %c147 = arith.constant 147 : index
    %90 = vector.load %arg7[%c0_59, %c147] : memref<8x544xf32, #tpu.memory_space<vmem>>, vector<8x288xf32>
    %91 = tpu.concatenate %82, %83, %84, %85, %86, %87, %88, %89, %90 in 0 : vector<8x288xf32>, vector<8x288xf32>, vector<8x288xf32>, vector<8x288xf32>, vector<8x288xf32>, vector<8x288xf32>, vector<8x288xf32>, vector<8x288xf32>, vector<8x288xf32> -> vector<72x288xf32>
    %cst_60 = arith.constant dense<0.000000e+00> : vector<8x288xf32>
    %92 = tpu.matmul %81, %91, %cst_60 {dimension_numbers = #tpu.dot_dimension_numbers<[1], [0], [0], [1], [0, 0, 1, 1], [], []>} : vector<8x72xf32>, vector<72x288xf32>, vector<8x288xf32> -> vector<8x288xf32>
    %c0_61 = arith.constant 0 : index
    %c2 = arith.constant 2 : index
    %93 = vector.load %arg5[%c0_61, %c2] : memref<16x128xf32, #tpu.memory_space<vmem>>, vector<8x1xf32>
    %94 = vector.broadcast %93 : vector<8x1xf32> to vector<8x288xf32>
    %95 = arith.addf %92, %94 : vector<8x288xf32>
    %cst_62 = arith.constant 0.000000e+00 : f32
    %96 = vector.broadcast %cst_62 : f32 to vector<8x288xf32>
    %97 = arith.maximumf %95, %96 : vector<8x288xf32>
    %98 = vector.broadcast %4 : vector<1x288xf32> to vector<8x288xf32>
    %99 = arith.mulf %97, %98 : vector<8x288xf32>
    %c0_63 = arith.constant 0 : index
    %c128_64 = arith.constant 128 : index
    %100 = vector.load %arg7[%c0_63, %c128_64] : memref<8x544xf32, #tpu.memory_space<vmem>>, vector<8x288xf32>
    tpu.vector_store %arg7[%c0_63, %c128_64], %99 {strides = array<i32>} : memref<8x544xf32, #tpu.memory_space<vmem>>, vector<8x288xf32>,
    %c24 = arith.constant 24 : index
    %c0_65 = arith.constant 0 : index
    %101 = vector.load %arg4[%c24, %c0_65] : memref<72x128xf32, #tpu.memory_space<vmem>>, vector<8x72xf32>
    %c0_66 = arith.constant 0 : index
    %c109_67 = arith.constant 109 : index
    %102 = vector.load %arg7[%c0_66, %c109_67] : memref<8x544xf32, #tpu.memory_space<vmem>>, vector<8x288xf32>
    %c0_68 = arith.constant 0 : index
    %c110_69 = arith.constant 110 : index
    %103 = vector.load %arg7[%c0_68, %c110_69] : memref<8x544xf32, #tpu.memory_space<vmem>>, vector<8x288xf32>
    %c0_70 = arith.constant 0 : index
    %c111_71 = arith.constant 111 : index
    %104 = vector.load %arg7[%c0_70, %c111_71] : memref<8x544xf32, #tpu.memory_space<vmem>>, vector<8x288xf32>
    %c0_72 = arith.constant 0 : index
    %c127_73 = arith.constant 127 : index
    %105 = vector.load %arg7[%c0_72, %c127_73] : memref<8x544xf32, #tpu.memory_space<vmem>>, vector<8x288xf32>
    %c0_74 = arith.constant 0 : index
    %c128_75 = arith.constant 128 : index
    %106 = vector.load %arg7[%c0_74, %c128_75] : memref<8x544xf32, #tpu.memory_space<vmem>>, vector<8x288xf32>
    %c0_76 = arith.constant 0 : index
    %c129_77 = arith.constant 129 : index
    %107 = vector.load %arg7[%c0_76, %c129_77] : memref<8x544xf32, #tpu.memory_space<vmem>>, vector<8x288xf32>
    %c0_78 = arith.constant 0 : index
    %c145_79 = arith.constant 145 : index
    %108 = vector.load %arg7[%c0_78, %c145_79] : memref<8x544xf32, #tpu.memory_space<vmem>>, vector<8x288xf32>
    %c0_80 = arith.constant 0 : index
    %c146_81 = arith.constant 146 : index
    %109 = vector.load %arg7[%c0_80, %c146_81] : memref<8x544xf32, #tpu.memory_space<vmem>>, vector<8x288xf32>
    %c0_82 = arith.constant 0 : index
    %c147_83 = arith.constant 147 : index
    %110 = vector.load %arg7[%c0_82, %c147_83] : memref<8x544xf32, #tpu.memory_space<vmem>>, vector<8x288xf32>
    %111 = tpu.concatenate %102, %103, %104, %105, %106, %107, %108, %109, %110 in 0 : vector<8x288xf32>, vector<8x288xf32>, vector<8x288xf32>, vector<8x288xf32>, vector<8x288xf32>, vector<8x288xf32>, vector<8x288xf32>, vector<8x288xf32>, vector<8x288xf32> -> vector<72x288xf32>
    %cst_84 = arith.constant dense<0.000000e+00> : vector<8x288xf32>
    %112 = tpu.matmul %101, %111, %cst_84 {dimension_numbers = #tpu.dot_dimension_numbers<[1], [0], [0], [1], [0, 0, 1, 1], [], []>} : vector<8x72xf32>, vector<72x288xf32>, vector<8x288xf32> -> vector<8x288xf32>
    %c0_85 = arith.constant 0 : index
    %c3 = arith.constant 3 : index
    %113 = vector.load %arg5[%c0_85, %c3] : memref<16x128xf32, #tpu.memory_space<vmem>>, vector<8x1xf32>
    %114 = vector.broadcast %113 : vector<8x1xf32> to vector<8x288xf32>
    %115 = arith.addf %112, %114 : vector<8x288xf32>
    %c0_86 = arith.constant 0 : index
    %c0_87 = arith.constant 0 : index
    %c128_88 = arith.constant 128 : index
    %116 = vector.load %arg1[%c0_86, %c0_87, %c128_88] : memref<1x8x544xf32, #tpu.memory_space<vmem>>, vector<1x8x288xf32>
    %117 = vector.shape_cast %116 : vector<1x8x288xf32> to vector<8x288xf32>
    %118 = arith.addf %115, %117 : vector<8x288xf32>
    %c0_89 = arith.constant 0 : index
    %c0_90 = arith.constant 0 : index
    %c0_91 = arith.constant 0 : index
    %119 = vector.load %arg6[%c0_89, %c0_90, %c0_91] : memref<1x8x288xf32, #tpu.memory_space<vmem>>, vector<1x8x288xf32>
    %120 = vector.shape_cast %119 : vector<1x8x288xf32> to vector<8x288xf32>
    %121 = vector.shape_cast %118 : vector<8x288xf32> to vector<1x8x288xf32>
    tpu.vector_store %arg6[%c0_89, %c0_90, %c0_91], %121 {strides = array<i32>} : memref<1x8x288xf32, #tpu.memory_space<vmem>>, vector<1x8x288xf32>,
    return
  }
  func.func @transform_0(%arg0: i32) -> (i32, i32, i32) {
    %c0_i32 = arith.constant 0 : i32
    %c0_i32_0 = arith.constant 0 : i32
    %c0_i32_1 = arith.constant 0 : i32
    return %arg0, %c0_i32, %c0_i32_0 : i32, i32, i32
  }
  func.func @transform_1(%arg0: i32) -> (i32, i32, i32) {
    %c0_i32 = arith.constant 0 : i32
    %c0_i32_0 = arith.constant 0 : i32
    %c0_i32_1 = arith.constant 0 : i32
    return %arg0, %c0_i32, %c0_i32_0 : i32, i32, i32
  }
  func.func @transform_2(%arg0: i32) -> (i32, i32) {
    %c0_i32 = arith.constant 0 : i32
    %c0_i32_0 = arith.constant 0 : i32
    %c0_i32_1 = arith.constant 0 : i32
    return %c0_i32, %c0_i32_0 : i32, i32
  }
  func.func @transform_3(%arg0: i32) -> (i32, i32) {
    %c0_i32 = arith.constant 0 : i32
    %c0_i32_0 = arith.constant 0 : i32
    %c0_i32_1 = arith.constant 0 : i32
    return %c0_i32, %c0_i32_0 : i32, i32
  }
  func.func @transform_4(%arg0: i32) -> (i32, i32) {
    %c0_i32 = arith.constant 0 : i32
    %c0_i32_0 = arith.constant 0 : i32
    %c0_i32_1 = arith.constant 0 : i32
    return %c0_i32, %c0_i32_0 : i32, i32
  }
  func.func @transform_5(%arg0: i32) -> (i32, i32, i32) {
    %c0_i32 = arith.constant 0 : i32
    %c0_i32_0 = arith.constant 0 : i32
    %c0_i32_1 = arith.constant 0 : i32
    return %arg0, %c0_i32, %c0_i32_0 : i32, i32, i32
  }
}

</mosaic_0001>

<llo_original>
// kernel: tpu_custom_call.1
$region0: #{tpu_custom_call.1}
  #allocation0 [shape = 'u32[]', space=smem, size = 0x4, offset = 0x4, fixed_abs, tag = 'smem constant byte address 0x4 - core index']
  #allocation1 [shape = 'u32[72,128]{1,0:T(1,128)}', space=vmem, size = 0x9000, scoped, tag = 'internal scratch']
  #allocation2 [shape = 'f32[8,544]{1,0:T(8,128)}', space=vmem, size = 0x5000, scoped, tag = 'scratch operand']
  %s0 = inlined_call_operand.hbm [shape: f32[2,8,544], index: 0, kind: input, shape index: {}]
  %s1 = inlined_call_operand.hbm [shape: f32[2,8,288], index: 1, kind: input, shape index: {}]
  %s2 = inlined_call_operand.hbm [shape: f32[1,288], index: 2, kind: input, shape index: {}]
  %s3 = inlined_call_operand.hbm [shape: f32[72,128], index: 3, kind: input, shape index: {}]
  %s4 = inlined_call_operand.hbm [shape: f32[16,128], index: 4, kind: input, shape index: {}]
  %s5 = inlined_call_operand.hbm [shape: f32[2,8,288], index: 5, kind: output, shape index: {}]
  %s6 = sld [smem:[#allocation0]]
  $region73: #{tpu_custom_call.1} parent=0
    _
  %s8 = ssub.s32 1, %s6
  %s9 = scalar_select 0, %s8, %s6
  $region1: #{tpu_custom_call.1} parent=0
    #allocation3 [shape = 'u8[40960]{0}', space=vmem, size = 0xa000, scoped, tag = 'input window, operand 0']
    #allocation4 [shape = 's32[2]{0}', space=sflag, size = 0x8, scoped, tag = 'scoped memory for tpu_custom_call.1']
    #allocation5 [shape = 's32[2]{0}', space=sflag, size = 0x8, scoped, tag = 'scoped memory for tpu_custom_call.1']
    #allocation6 [shape = 'u8[24576]{0}', space=vmem, size = 0x6000, scoped, tag = 'input window, operand 1']
    #allocation7 [shape = 's32[2]{0}', space=sflag, size = 0x8, scoped, tag = 'scoped memory for tpu_custom_call.1']
    #allocation8 [shape = 'u8[1536]{0}', space=vmem, size = 0x800, scoped, tag = 'input window, operand 2, single buffered']
    #allocation9 [shape = 'u8[36864]{0}', space=vmem, size = 0x9000, scoped, tag = 'input window, operand 3, single buffered']
    #allocation10 [shape = 's32[1]{0}', space=sflag, size = 0x4, scoped, tag = 'scoped memory for tpu_custom_call.1']
    #allocation11 [shape = 'u8[8192]{0}', space=vmem, size = 0x2000, scoped, tag = 'input window, operand 4, single buffered']
    #allocation12 [shape = 'u8[24576]{0}', space=vmem, size = 0x6000, scoped, tag = 'output window, operand 0']
    %10 = vsyncpa [#allocation4], 0
    %s11 = scalar_lea.sflag [#allocation4], 1
    %12 = vsyncpa %s11, 0
    %13 = vsyncpa [#allocation7], 0
    %s14 = scalar_lea.sflag [#allocation7], 1
    %15 = vsyncpa %s14, 0
    %16 = vsyncpa [#allocation10], 0
    %17 = vsyncpa [#allocation5], 0
    %s18 = scalar_lea.sflag [#allocation5], 1
    %19 = vsyncpa %s18, 0
    loop: start=0, step=1, limit=4
    $region2: #{tpu_custom_call.1} parent=1 // loop_pre_header
      _
    $region3: #{tpu_custom_call.1} parent=1 // loop_header
      %s21 = sphi 0, %s25
      %p22 = scmp.ge.s32.totalorder %s21, 4
      %s31 = sphi 0, %s33
      %s34 = sphi 0, %s31
      %s35 = sphi 0, %s34
      %s51 = sphi 0, %s35
      %s57 = sphi 0, %s59
      %s60 = sphi 0, %s57
      %s61 = sphi 0, %s60
      %s77 = sphi 0, %s61
      %s81 = sphi 0, %s81
      %s83 = sphi 0, %s81
      %s84 = sphi 0, %s83
      %s98 = sphi 0, %s84
      %s102 = sphi 0, %s102
      %s104 = sphi 0, %s102
      %s105 = sphi 0, %s104
      %s119 = sphi 0, %s105
      %s123 = sphi 0, %s123
      %s125 = sphi 0, %s123
      %s126 = sphi 0, %s125
      %s140 = sphi 0, %s126
      %s146 = sphi 0, %s148
      %s149 = sphi 0, %s146
      %s150 = sphi 0, %s149
      %s166 = sphi 0, %s150
    $region4: #{tpu_custom_call.1} parent=1 // loop_header_branch
      %24 = sbr.rel (%p22) target = $region8
    $region5: #{tpu_custom_call.1} parent=1 // loop_body
      %s26 = ssub.s32 %s21, 1
      %s27 = ssub.s32 %s21, 2
      %s28 = sadd.s32 %s21, 1
      %s29 = ssub.s32 %s21, %s28
      %p30 = scmp.eq.s32.totalorder %s29, 0
      %s32 = sadd.s32 %s31, 1
      %s33 = scalar_select %p30, %s31, %s32
      %p36 = pneg %p30
      %p37 = scmp.eq.s32.totalorder %s21, 1
      %p38 = por %p36, %p37
      %p39 = scmp.ne.s32.totalorder %s31, %s34
      %p40 = scmp.eq.s32.totalorder %s21, 0
      %p41 = por %p39, %p40
      %p42 = scmp.ne.s32.totalorder %s31, %s34
      %p43 = scmp.eq.s32.totalorder %s26, 1
      %p44 = por %p42, %p43
      %p45 = scmp.ne.s32.totalorder %s34, %s35
      %p46 = scmp.eq.s32.totalorder %s26, 0
      %p47 = por %p45, %p46
      %p48 = scmp.ne.s32.totalorder %s34, %s35
      %p49 = scmp.eq.s32.totalorder %s27, 1
      %p50 = por %p48, %p49
      %p52 = scmp.ne.s32.totalorder %s35, %s51
      %p53 = scmp.eq.s32.totalorder %s27, 0
      %p54 = por %p52, %p53
      %s55 = ssub.s32 %s21, %s28
      %p56 = scmp.eq.s32.totalorder %s55, 0
      %s58 = sadd.s32 %s57, 1
      %s59 = scalar_select %p56, %s57, %s58
      %p62 = pneg %p56
      %p63 = scmp.eq.s32.totalorder %s21, 1
      %p64 = por %p62, %p63
      %p65 = scmp.ne.s32.totalorder %s57, %s60
      %p66 = scmp.eq.s32.totalorder %s21, 0
      %p67 = por %p65, %p66
      %p68 = scmp.ne.s32.totalorder %s57, %s60
      %p69 = scmp.eq.s32.totalorder %s26, 1
      %p70 = por %p68, %p69
      %p71 = scmp.ne.s32.totalorder %s60, %s61
      %p72 = scmp.eq.s32.totalorder %s26, 0
      %p73 = por %p71, %p72
      %p74 = scmp.ne.s32.totalorder %s60, %s61
      %p75 = scmp.eq.s32.totalorder %s27, 1
      %p76 = por %p74, %p75
      %p78 = scmp.ne.s32.totalorder %s61, %s77
      %p79 = scmp.eq.s32.totalorder %s27, 0
      %p80 = por %p78, %p79
      %s82 = sadd.s32 %s81, 1
      %p85 = scmp.eq.s32.totalorder %s21, 1
      %p86 = scmp.ne.s32.totalorder %s81, %s83
      %p87 = scmp.eq.s32.totalorder %s21, 0
      %p88 = por %p86, %p87
      %p89 = scmp.ne.s32.totalorder %s81, %s83
      %p90 = scmp.eq.s32.totalorder %s26, 1
      %p91 = por %p89, %p90
      %p92 = scmp.ne.s32.totalorder %s83, %s84
      %p93 = scmp.eq.s32.totalorder %s26, 0
      %p94 = por %p92, %p93
      %p95 = scmp.ne.s32.totalorder %s83, %s84
      %p96 = scmp.eq.s32.totalorder %s27, 1
      %p97 = por %p95, %p96
      %p99 = scmp.ne.s32.totalorder %s84, %s98
      %p100 = scmp.eq.s32.totalorder %s27, 0
      %p101 = por %p99, %p100
      %s103 = sadd.s32 %s102, 1
      %p106 = scmp.eq.s32.totalorder %s21, 1
      %p107 = scmp.ne.s32.totalorder %s102, %s104
      %p108 = scmp.eq.s32.totalorder %s21, 0
      %p109 = por %p107, %p108
      %p110 = scmp.ne.s32.totalorder %s102, %s104
      %p111 = scmp.eq.s32.totalorder %s26, 1
      %p112 = por %p110, %p111
      %p113 = scmp.ne.s32.totalorder %s104, %s105
      %p114 = scmp.eq.s32.totalorder %s26, 0
      %p115 = por %p113, %p114
      %p116 = scmp.ne.s32.totalorder %s104, %s105
      %p117 = scmp.eq.s32.totalorder %s27, 1
      %p118 = por %p116, %p117
      %p120 = scmp.ne.s32.totalorder %s105, %s119
      %p121 = scmp.eq.s32.totalorder %s27, 0
      %p122 = por %p120, %p121
      %s124 = sadd.s32 %s123, 1
      %p127 = scmp.eq.s32.totalorder %s21, 1
      %p128 = scmp.ne.s32.totalorder %s123, %s125
      %p129 = scmp.eq.s32.totalorder %s21, 0
      %p130 = por %p128, %p129
      %p131 = scmp.ne.s32.totalorder %s123, %s125
      %p132 = scmp.eq.s32.totalorder %s26, 1
      %p133 = por %p131, %p132
      %p134 = scmp.ne.s32.totalorder %s125, %s126
      %p135 = scmp.eq.s32.totalorder %s26, 0
      %p136 = por %p134, %p135
      %p137 = scmp.ne.s32.totalorder %s125, %s126
      %p138 = scmp.eq.s32.totalorder %s27, 1
      %p139 = por %p137, %p138
      %p141 = scmp.ne.s32.totalorder %s126, %s140
      %p142 = scmp.eq.s32.totalorder %s27, 0
      %p143 = por %p141, %p142
      %s144 = ssub.s32 %s21, %s28
      %p145 = scmp.eq.s32.totalorder %s144, 0
      %s147 = sadd.s32 %s146, 1
      %s148 = scalar_select %p145, %s146, %s147
      %p151 = pneg %p145
      %p152 = scmp.eq.s32.totalorder %s21, 1
      %p153 = por %p151, %p152
      %p154 = scmp.ne.s32.totalorder %s146, %s149
      %p155 = scmp.eq.s32.totalorder %s21, 0
      %p156 = por %p154, %p155
      %p157 = scmp.ne.s32.totalorder %s146, %s149
      %p158 = scmp.eq.s32.totalorder %s26, 1
      %p159 = por %p157, %p158
      %p160 = scmp.ne.s32.totalorder %s149, %s150
      %p161 = scmp.eq.s32.totalorder %s26, 0
      %p162 = por %p160, %p161
      %p163 = scmp.ne.s32.totalorder %s149, %s150
      %p164 = scmp.eq.s32.totalorder %s27, 1
      %p165 = por %p163, %p164
      %p167 = scmp.ne.s32.totalorder %s150, %s166
      %p168 = scmp.eq.s32.totalorder %s27, 0
      %p169 = por %p167, %p168
      %p170 = scmp.le.s32.totalorder 1, %s21
      %p171 = scmp.lt.s32.totalorder %s21, 3
      %p172 = pnand %p170, %p171
      %p173 = pneg %p172
      // Predicated region
      $region9: #{tpu_custom_call.1} parent=5 // pred_check
        _
      $region10: #{tpu_custom_call.1} parent=5 // pred_check_branch
        %175 = sbr.rel (%p172) target = $region12
      $region11: #{tpu_custom_call.1} parent=5 // pred_region
        %s176 = ssub.s32 %s21, 1
        // Predicated region
        $region13: #{tpu_custom_call.1} parent=11 // pred_check
          %p177 = pneg %p94
        $region14: #{tpu_custom_call.1} parent=11 // pred_check_branch
          %179 = sbr.rel (%p177) target = $region16
        $region15: #{tpu_custom_call.1} parent=11 // pred_region
          %181 = vsyncadd [#allocation7], 0
          %s183 = sshll.u32 %s2, 4
          %s184 = int_to_ptr.hbm [resolvable:$true] %s183
          %s185 = sshll.u32 [#allocation8], 4
          %s186 = int_to_ptr.vmem [resolvable:$true] %s185
          %188 = dma.hbm_to_vmem [thread:$0]  %s184, 48, %s186, [#allocation7]
        $region16: #{tpu_custom_call.1} parent=11 // pred_fallthru
          _
        // Predicated region
        $region17: #{tpu_custom_call.1} parent=11 // pred_check
          %p189 = pneg %p115
        $region18: #{tpu_custom_call.1} parent=11 // pred_check_branch
          %191 = sbr.rel (%p189) target = $region20
        $region19: #{tpu_custom_call.1} parent=11 // pred_region
          %193 = vsyncadd [#allocation10], 0
          %s194 = sshll.u32 %s3, 4
          %s195 = int_to_ptr.hbm [resolvable:$true] %s194
          %s196 = sshll.u32 [#allocation9], 4
          %s197 = int_to_ptr.vmem [resolvable:$true] %s196
          %202 = dma.hbm_to_vmem [thread:$0]  %s195, 1152, %s197, [#allocation10], 128, 128, 8
        $region20: #{tpu_custom_call.1} parent=11 // pred_fallthru
          _
        // Predicated region
        $region21: #{tpu_custom_call.1} parent=11 // pred_check
          %p203 = pneg %p136
        $region22: #{tpu_custom_call.1} parent=11 // pred_check_branch
          %205 = sbr.rel (%p203) target = $region24
        $region23: #{tpu_custom_call.1} parent=11 // pred_region
          %207 = vsyncadd [#allocation10], 0
          %s208 = sshll.u32 %s4, 4
          %s209 = int_to_ptr.hbm [resolvable:$true] %s208
          %s210 = sshll.u32 [#allocation11], 4
          %s211 = int_to_ptr.vmem [resolvable:$true] %s210
          %216 = dma.hbm_to_vmem [thread:$0]  %s209, 256, %s211, [#allocation10], 128, 128, 8
        $region24: #{tpu_custom_call.1} parent=11 // pred_fallthru
          _
      $region12: #{tpu_custom_call.1} parent=5 // pred_fallthru
        _
      %p217 = scmp.lt.s32.totalorder %s21, 2
      // Predicated region
      $region25: #{tpu_custom_call.1} parent=5 // pred_check
        %p218 = pneg %p217
      $region26: #{tpu_custom_call.1} parent=5 // pred_check_branch
        %220 = sbr.rel (%p218) target = $region28
      $region27: #{tpu_custom_call.1} parent=5 // pred_region
        // Predicated region
        $region29: #{tpu_custom_call.1} parent=27 // pred_check
          %p221 = pneg %p41
        $region30: #{tpu_custom_call.1} parent=27 // pred_check_branch
          %223 = sbr.rel (%p221) target = $region32
        $region31: #{tpu_custom_call.1} parent=27 // pred_region
          %s224 = sand.u32 %s31, 1
          %s225 = scalar_lea.sflag [#allocation4], %s224
          %s226 = sand.u32 %s31, 1
          %s227 = smul.addr %s226, 40
          %s228 = scalar_lea.vmem [#allocation3], %s227
          %230 = vsyncadd %s225, 0
          %s231 = smul.addr %s21, 5
          %s232 = smul.addr %s231, 8
          %s233 = scalar_lea.hbm %s0, %s232
          %s235 = sshll.u32 %s233, 4
          %s236 = int_to_ptr.hbm [resolvable:$true] %s235
          %s237 = sshll.u32 %s228, 4
          %s238 = int_to_ptr.vmem [resolvable:$true] %s237
          %240 = dma.hbm_to_vmem [thread:$0]  %s236, 640, %s238, %s225
        $region32: #{tpu_custom_call.1} parent=27 // pred_fallthru
          _
        // Predicated region
        $region33: #{tpu_custom_call.1} parent=27 // pred_check
          %p241 = pneg %p67
        $region34: #{tpu_custom_call.1} parent=27 // pred_check_branch
          %243 = sbr.rel (%p241) target = $region36
        $region35: #{tpu_custom_call.1} parent=27 // pred_region
          %s244 = sand.u32 %s21, 1
          %s245 = scalar_lea.sflag [#allocation7], %s244
          %s246 = sand.u32 %s57, 1
          %s247 = smul.addr %s246, 24
          %s248 = scalar_lea.vmem [#allocation6], %s247
          %250 = vsyncadd %s245, 0
          %s251 = smul.addr %s21, 3
          %s252 = smul.addr %s251, 8
          %s253 = scalar_lea.hbm %s1, %s252
          %s255 = sshll.u32 %s253, 4
          %s256 = int_to_ptr.hbm [resolvable:$true] %s255
          %s257 = sshll.u32 %s248, 4
          %s258 = int_to_ptr.vmem [resolvable:$true] %s257
          %260 = dma.hbm_to_vmem [thread:$0]  %s256, 384, %s258, %s245
        $region36: #{tpu_custom_call.1} parent=27 // pred_fallthru
          _
      $region28: #{tpu_custom_call.1} parent=5 // pred_fallthru
        _
      %p261 = scmp.le.s32.totalorder 1, %s21
      %p262 = scmp.lt.s32.totalorder %s21, 3
      %p263 = pnand %p261, %p262
      %p264 = pneg %p263
      // Predicated region
      $region37: #{tpu_custom_call.1} parent=5 // pred_check
        _
      $region38: #{tpu_custom_call.1} parent=5 // pred_check_branch
        %266 = sbr.rel (%p263) target = $region40
      $region39: #{tpu_custom_call.1} parent=5 // pred_region
        %s267 = ssub.s32 %s21, 1
        %s268 = sand.u32 %s34, 1
        %s269 = scalar_lea.sflag [#allocation4], %s268
        %s270 = sand.u32 %s34, 1
        %s271 = smul.addr %s270, 40
        %s272 = scalar_lea.vmem [#allocation3], %s271
        // Predicated region
        $region41: #{tpu_custom_call.1} parent=39 // pred_check
          %p273 = pneg %p47
        $region42: #{tpu_custom_call.1} parent=39 // pred_check_branch
          %275 = sbr.rel (%p273) target = $region44
        $region43: #{tpu_custom_call.1} parent=39 // pred_region
          %277 = dma.done %s269, 640
        $region44: #{tpu_custom_call.1} parent=39 // pred_fallthru
          _
        %s278 = sand.u32 %s26, 1
        %s279 = scalar_lea.sflag [#allocation7], %s278
        %s280 = sand.u32 %s60, 1
        %s281 = smul.addr %s280, 24
        %s282 = scalar_lea.vmem [#allocation6], %s281
        // Predicated region
        $region45: #{tpu_custom_call.1} parent=39 // pred_check
          %p283 = pneg %p73
        $region46: #{tpu_custom_call.1} parent=39 // pred_check_branch
          %285 = sbr.rel (%p283) target = $region48
        $region47: #{tpu_custom_call.1} parent=39 // pred_region
          %287 = dma.done %s279, 384
        $region48: #{tpu_custom_call.1} parent=39 // pred_fallthru
          _
        // Predicated region
        $region49: #{tpu_custom_call.1} parent=39 // pred_check
          %p288 = pneg %p94
        $region50: #{tpu_custom_call.1} parent=39 // pred_check_branch
          %290 = sbr.rel (%p288) target = $region52
        $region51: #{tpu_custom_call.1} parent=39 // pred_region
          %292 = dma.done [#allocation7], 48
        $region52: #{tpu_custom_call.1} parent=39 // pred_fallthru
          _
        // Predicated region
        $region53: #{tpu_custom_call.1} parent=39 // pred_check
          %p293 = pneg %p115
        $region54: #{tpu_custom_call.1} parent=39 // pred_check_branch
          %295 = sbr.rel (%p293) target = $region56
        $region55: #{tpu_custom_call.1} parent=39 // pred_region
          %297 = dma.done [#allocation10], 1152
        $region56: #{tpu_custom_call.1} parent=39 // pred_fallthru
          _
        // Predicated region
        $region57: #{tpu_custom_call.1} parent=39 // pred_check
          %p298 = pneg %p136
        $region58: #{tpu_custom_call.1} parent=39 // pred_check_branch
          %300 = sbr.rel (%p298) target = $region60
        $region59: #{tpu_custom_call.1} parent=39 // pred_region
          %302 = dma.done [#allocation10], 256
        $region60: #{tpu_custom_call.1} parent=39 // pred_fallthru
          _
        %s303 = sand.u32 %s34, 1
        %s304 = scalar_lea.sflag [#allocation4], %s303
        %s305 = sand.u32 %s34, 1
        %s306 = smul.addr %s305, 40
        %s307 = scalar_lea.vmem [#allocation3], %s306
        %p308 = pneg %p47
        %p309 = pneg %p44
        %s310 = sand.u32 %s26, 1
        %s311 = scalar_lea.sflag [#allocation7], %s310
        %s312 = sand.u32 %s60, 1
        %s313 = smul.addr %s312, 24
        %s314 = scalar_lea.vmem [#allocation6], %s313
        %p315 = pneg %p73
        %p316 = pneg %p70
        %p317 = pneg %p94
        %p318 = pneg %p91
        %p319 = pneg %p115
        %p320 = pneg %p112
        %p321 = pneg %p136
        %p322 = pneg %p133
        %p323 = pneg %p162
        %p324 = pneg %p159
        %s325 = sand.u32 %s149, 1
        %s326 = scalar_lea.sflag [#allocation5], %s325
        %s327 = sand.u32 %s149, 1
        %s328 = smul.addr %s327, 24
        %s329 = scalar_lea.vmem [#allocation12], %s328
        %330 = vst [vmem:[#allocation2] sm:$0xff] 0.0
        %vm331 = vcmask 1047808
        %332 = vst.msk [vmem:[#allocation2 + $0x18] sm:$0xff] %vm331, 0.0
        %vm333 = vcmask 261120
        %334 = vst.msk [vmem:[#allocation2 + $0x20] sm:$0xff] %vm333, 0.0
        %v335 = vld [vmem:[#allocation8] sm:$0x7]
        %v336 = vld [vmem:[#allocation9] sm:$0xff]
        %v337 = vld [vmem:[%s272] sm:$0xff]
        %v338 = vld [vmem:[%s272 + $0x8] sm:$0xff]
        %v339 = vld [vmem:[%s272 + $0x10] sm:$0xff]
        %v340 = vld [vmem:[%s272 + $0x18] sm:$0xff]
        %345 = vrot.lane.b32.xlu0 %v337, 111
        %v346 = vpop.permute.xlu0 %345
        %347 = vrot.lane.b32.xlu0 %v338, 111
        %v348 = vpop.permute.xlu0 %347
        %349 = vrot.lane.b32.xlu0 %v339, 111
        %v350 = vpop.permute.xlu0 %349
        %351 = vrot.lane.b32.xlu0 %v340, 111
        %v352 = vpop.permute.xlu0 %351
        %vm353 = vcmask 908288
        %v354 = vsel %vm353, %v346, %v348
        %v355 = vsel %vm353, %v348, %v350
        %v356 = vsel %vm353, %v350, %v352
        %357 = vrot.lane.b32.xlu0 %v338, 110
        %v358 = vpop.permute.xlu0 %357
        %359 = vrot.lane.b32.xlu0 %v339, 110
        %v360 = vpop.permute.xlu0 %359
        %361 = vrot.lane.b32.xlu0 %v340, 110
        %v362 = vpop.permute.xlu0 %361
        %vm363 = vcmask 900096
        %v364 = vsel %vm363, %v358, %v360
        %v365 = vsel %vm363, %v360, %v362
        %366 = vrot.lane.b32.xlu0 %v338, 109
        %v367 = vpop.permute.xlu0 %366
        %368 = vrot.lane.b32.xlu0 %v339, 109
        %v369 = vpop.permute.xlu0 %368
        %370 = vrot.lane.b32.xlu0 %v340, 109
        %v371 = vpop.permute.xlu0 %370
        %vm372 = vcmask 891904
        %v373 = vsel %vm372, %v367, %v369
        %v374 = vsel %vm372, %v369, %v371
        %375 = vrot.lane.b32.xlu0 %v338, 92
        %v376 = vpop.permute.xlu0 %375
        %377 = vrot.lane.b32.xlu0 %v339, 92
        %v378 = vpop.permute.xlu0 %377
        %379 = vrot.lane.b32.xlu0 %v340, 92
        %v380 = vpop.permute.xlu0 %379
        %vm381 = vcmask 752640
        %v382 = vsel %vm381, %v376, %v378
        %v383 = vsel %vm381, %v378, %v380
        %v384 = vld [vmem:[#allocation11] sm:$0xff]
        %386 = vset.pattern.permute.xlu0 0
        %387 = vperm.xlu0 %386, %v384
        %v388 = vpop.permute.xlu0 %387
        %390 = vrot.lane.b32.xlu0 %v337, 18
        %v391 = vpop.permute.xlu0 %390
        %392 = vrot.lane.b32.xlu0 %v338, 18
        %v393 = vpop.permute.xlu0 %392
        %394 = vrot.lane.b32.xlu0 %v339, 18
        %v395 = vpop.permute.xlu0 %394
        %396 = vrot.lane.b32.xlu0 %v340, 18
        %v397 = vpop.permute.xlu0 %396
        %398 = vrot.lane.b32.xlu0 %v354, 18
        %v399 = vpop.permute.xlu0 %398
        %400 = vrot.lane.b32.xlu0 %v355, 18
        %v401 = vpop.permute.xlu0 %400
        %402 = vrot.lane.b32.xlu0 %v356, 18
        %v403 = vpop.permute.xlu0 %402
        %404 = vrot.lane.b32.xlu0 %v352, 18
        %v405 = vpop.permute.xlu0 %404
        %406 = vrot.lane.b32.xlu0 %v358, 18
        %v407 = vpop.permute.xlu0 %406
        %408 = vrot.lane.b32.xlu0 %v364, 18
        %v409 = vpop.permute.xlu0 %408
        %410 = vrot.lane.b32.xlu0 %v365, 18
        %v411 = vpop.permute.xlu0 %410
        %412 = vrot.lane.b32.xlu0 %v362, 18
        %v413 = vpop.permute.xlu0 %412
        %414 = vrot.lane.b32.xlu0 %v367, 18
        %v415 = vpop.permute.xlu0 %414
        %416 = vrot.lane.b32.xlu0 %v373, 18
        %v417 = vpop.permute.xlu0 %416
        %418 = vrot.lane.b32.xlu0 %v374, 18
        %v419 = vpop.permute.xlu0 %418
        %420 = vrot.lane.b32.xlu0 %v371, 18
        %v421 = vpop.permute.xlu0 %420
        %422 = vrot.lane.b32.xlu0 %v376, 18
        %v423 = vpop.permute.xlu0 %422
        %424 = vrot.lane.b32.xlu0 %v382, 18
        %v425 = vpop.permute.xlu0 %424
        %426 = vrot.lane.b32.xlu0 %v383, 18
        %v427 = vpop.permute.xlu0 %426
        %428 = vrot.lane.b32.xlu0 %v380, 18
        %v429 = vpop.permute.xlu0 %428
        %vm430 = vcmask 146432
        %v431 = vsel %vm430, %v391, %v393
        %v432 = vsel %vm430, %v393, %v395
        %v433 = vsel %vm430, %v395, %v397
        %v434 = vsel %vm430, %v399, %v401
        %v435 = vsel %vm430, %v401, %v403
        %v436 = vsel %vm430, %v403, %v405
        %v437 = vsel %vm430, %v407, %v409
        %v438 = vsel %vm430, %v409, %v411
        %v439 = vsel %vm430, %v411, %v413
        %v440 = vsel %vm430, %v415, %v417
        %v441 = vsel %vm430, %v417, %v419
        %v442 = vsel %vm430, %v419, %v421
        %v443 = vsel %vm430, %v423, %v425
        %v444 = vsel %vm430, %v425, %v427
        %v445 = vsel %vm430, %v427, %v429
        %vm461 = vcmask 326656
        %v463 = vsel %vm461, %v336, 0
        %465 = vmatpush.msra.mxu0 0.0
        %466 = vmatpush.msra.mxu0 0.0
        %467 = vmatpush.msra.mxu0 0.0
        %468 = vmatpush.msra.mxu0 0.0
        %469 = vmatpush.msra.mxu0 0.0
        %470 = vmatpush.msra.mxu0 0.0
        %471 = vmatpush.msra.mxu0 0.0
        %472 = vmatpush.msra.mxu0 0.0
        %473 = vmatpush.msra.mxu0 0.0
        %474 = vmatpush.msra.mxu0 0.0
        %475 = vmatpush.msra.mxu0 0.0
        %476 = vmatpush.msra.mxu0 %v443
        %477 = vmatpush.msra.mxu0 %v440
        %478 = vmatpush.msra.mxu0 %v437
        %479 = vmatpush.msra.mxu0 %v434
        %480 = vmatpush.msra.mxu0 %v431
        %481 = vmatmul.f32.gmra.mxu0 %v463
        %v482 = vpop.f32.mrf.mxu0
        %v483 = vadd.f32 %v388, %v482
        %484 = vdwg.mxu0
        %485 = vmatpush.msra.mxu0 0.0
        %486 = vmatpush.msra.mxu0 0.0
        %487 = vmatpush.msra.mxu0 0.0
        %488 = vmatpush.msra.mxu0 0.0
        %489 = vmatpush.msra.mxu0 0.0
        %490 = vmatpush.msra.mxu0 0.0
        %491 = vmatpush.msra.mxu0 0.0
        %492 = vmatpush.msra.mxu0 0.0
        %493 = vmatpush.msra.mxu0 0.0
        %494 = vmatpush.msra.mxu0 0.0
        %495 = vmatpush.msra.mxu0 0.0
        %496 = vmatpush.msra.mxu0 %v444
        %497 = vmatpush.msra.mxu0 %v441
        %498 = vmatpush.msra.mxu0 %v438
        %499 = vmatpush.msra.mxu0 %v435
        %500 = vmatpush.msra.mxu0 %v432
        %501 = vmatmul.f32.gmra.mxu0 %v463
        %v502 = vpop.f32.mrf.mxu0
        %v503 = vadd.f32 %v388, %v502
        %504 = vdwg.mxu0
        %505 = vmatpush.msra.mxu0 0.0
        %506 = vmatpush.msra.mxu0 0.0
        %507 = vmatpush.msra.mxu0 0.0
        %508 = vmatpush.msra.mxu0 0.0
        %509 = vmatpush.msra.mxu0 0.0
        %510 = vmatpush.msra.mxu0 0.0
        %511 = vmatpush.msra.mxu0 0.0
        %512 = vmatpush.msra.mxu0 0.0
        %513 = vmatpush.msra.mxu0 0.0
        %514 = vmatpush.msra.mxu0 0.0
        %515 = vmatpush.msra.mxu0 0.0
        %516 = vmatpush.msra.mxu0 %v445
        %517 = vmatpush.msra.mxu0 %v442
        %518 = vmatpush.msra.mxu0 %v439
        %519 = vmatpush.msra.mxu0 %v436
        %520 = vmatpush.msra.mxu0 %v433
        %521 = vmatmul.f32.gmra.mxu0 %v463
        %v522 = vpop.f32.mrf.mxu0
        %v523 = vadd.f32 %v388, %v522
        %524 = vdwg.mxu0
        %v526 = vperm.slane %v335, 0
        %v527 = vperm.slane %v335, 1
        %v528 = vperm.slane %v335, 2
        %v532 = vmul.f32 %v483, %v526
        %v533 = vmul.f32 %v503, %v527
        %v534 = vmul.f32 %v523, %v528
        %v535 = vld [vmem:[%s282] sm:$0xff]
        %v536 = vld [vmem:[%s282 + $0x8] sm:$0xff]
        %v537 = vld [vmem:[%s282 + $0x10] sm:$0xff]
        %v538 = vadd.f32 %v532, %v533
        %v539 = vsel %vm333, %v534, 0.0
        %v540 = vadd.f32 %v538, %v539
        %541 = vadd.xlane.f32.xlu0 %v540
        %v542 = vpop.xlane.xlu0 %541
        %v543 = vadd.f32 %v535, %v536
        %v544 = vsel %vm333, %v537, 0.0
        %v545 = vadd.f32 %v543, %v544
        %546 = vadd.xlane.f32.xlu0 %v545
        %v547 = vpop.xlane.xlu0 %546
        %v548 = vmul.f32 %v542, 0.00390625
        %v549 = vmul.f32 %v547, 0.00390625
        %vm550 = vcmp.gt.f32.partialorder %v335, 0.0
        %v551 = vsel %vm550, 1, 0
        %v552 = vperm.slane %v551, 0
        %v553 = vperm.slane %v551, 1
        %v554 = vperm.slane %v551, 2
        %vm555 = vcmp.eq.s32.totalorder %v552, 1
        %vm556 = vcmp.eq.s32.totalorder %v553, 1
        %vm557 = vcmp.eq.s32.totalorder %v554, 1
        %v558 = vsel %vm555, %v532, -inf
        %v559 = vsel %vm556, %v533, -inf
        %v560 = vsel %vm557, %v534, -inf
        %v561 = vsel %vm555, %v535, -inf
        %v562 = vsel %vm556, %v536, -inf
        %v563 = vsel %vm557, %v537, -inf
        %v564 = vsel %vm333, %v560, -inf
        %v565 = vmax.f32 %v558, %v564
        %v566 = vmax.f32 %v565, %v559
        %567 = vmax.xlane.f32.xlu0 %v566
        %v568 = vpop.xlane.xlu0 %567
        %v569 = vsel %vm333, %v563, -inf
        %v570 = vmax.f32 %v561, %v569
        %v571 = vmax.f32 %v570, %v562
        %572 = vmax.xlane.f32.xlu0 %v571
        %v573 = vpop.xlane.xlu0 %572
        %v574 = vld [vmem:[#allocation9 + $0x20] sm:$0xff]
        %v575 = vld [vmem:[#allocation9 + $0x28] sm:$0xff]
        %v576 = vld [vmem:[#allocation9 + $0x30] sm:$0xff]
        %v577 = vld [vmem:[#allocation9 + $0x38] sm:$0xff]
        %v578 = vld [vmem:[#allocation9 + $0x40] sm:$0x1]
        %v579 = vld [vmem:[#allocation11] sm:$0xff]
        %v580 = vld [vmem:[#allocation11 + $0x8] sm:$0xff]
        %v581 = vmul.f32 %v574, %v548
        %v582 = vmul.f32 %v575, %v549
        %vm583 = vcmask 7168
        %v584 = vsel %vm583, %v581, 0.0
        %v585 = vsel %vm583, %v582, 0.0
        %v586 = vadd.f32 %v584, %v585
        %v587 = vrot.slane %v586, 4
        %v588 = vadd.f32 %v586, %v587
        %v589 = vrot.slane %v588, 2
        %v590 = vadd.f32 %v588, %v589
        %v591 = vrot.slane %v590, 1
        %v592 = vadd.f32 %v590, %v591
        %v593 = vadd.f32 %v592, %v578
        %v594 = vmax.f32 %v593, 0.0
        %v595 = vperm.slane %v594, 0
        %v596 = vmul.f32 %v576, %v595
        %v597 = vmul.f32 %v577, %v595
        %v598 = vadd.f32 %v596, 0.0
        %v599 = vadd.f32 %v597, 0.0
        %602 = vrot.lane.b32.xlu0 %v579, 124
        %v603 = vpop.permute.xlu0 %602
        %604 = vrot.lane.b32.xlu0 %v580, 124
        %v605 = vpop.permute.xlu0 %604
        %v608 = vadd.f32 %v598, %v603
        %v609 = vadd.f32 %v599, %v605
        %v610 = vmul.f32 %v574, %v568
        %v611 = vmul.f32 %v575, %v573
        %v612 = vsel %vm583, %v610, 0.0
        %v613 = vsel %vm583, %v611, 0.0
        %v614 = vadd.f32 %v612, %v613
        %v615 = vrot.slane %v614, 4
        %v616 = vadd.f32 %v614, %v615
        %v617 = vrot.slane %v616, 2
        %v618 = vadd.f32 %v616, %v617
        %v619 = vrot.slane %v618, 1
        %v620 = vadd.f32 %v618, %v619
        %v621 = vadd.f32 %v620, %v578
        %v622 = vmax.f32 %v621, 0.0
        %v623 = vperm.slane %v622, 0
        %v624 = vmul.f32 %v576, %v623
        %v625 = vmul.f32 %v577, %v623
        %v626 = vadd.f32 %v624, 0.0
        %v627 = vadd.f32 %v625, 0.0
        %v628 = vadd.f32 %v626, %v603
        %v629 = vadd.f32 %v627, %v605
        %v630 = vadd.f32 %v608, %v628
        %v631 = vadd.f32 %v609, %v629
        %v632 = vlaneseq
        %v633 = vshrl.u32 %v632, 7
        %v634 = vadd.s32 %v633, 8
        %v635 = vlaneseq
        %v636 = vand.u32 %v635, 127
        %vm637 = vcmp.eq.s32.totalorder %v633, %v636
        %vm638 = vcmp.eq.s32.totalorder %v634, %v636
        %640 = vset.pattern.permute.xlu0 0
        %641 = vperm.xlu0 %640, %v630
        %v642 = vpop.permute.xlu0 %641
        %645 = vset.pattern.permute.xlu0 0
        %646 = vperm.xlu0 %645, %v631
        %v647 = vpop.permute.xlu0 %646
        %v649 = vsel %vm637, %v642, 0.0
        %v650 = vsel %vm638, %v647, 0.0
        %v651 = vld [vmem:[#allocation9 + $0x8] sm:$0xff]
        %vm652 = vcmask 130048
        %v654 = vsel %vm652, %v651, 0
        %656 = vmatpush.msra.mxu0 0.0
        %657 = vmatpush.msra.mxu0 0.0
        %658 = vmatpush.msra.mxu0 0.0
        %659 = vmatpush.msra.mxu0 0.0
        %660 = vmatpush.msra.mxu0 0.0
        %661 = vmatpush.msra.mxu0 0.0
        %662 = vmatpush.msra.mxu0 0.0
        %663 = vmatpush.msra.mxu0 0.0
        %664 = vmatpush.msra.mxu0 0.0
        %665 = vmatpush.msra.mxu0 0.0
        %666 = vmatpush.msra.mxu0 0.0
        %667 = vmatpush.msra.mxu0 0.0
        %668 = vmatpush.msra.mxu0 0.0
        %669 = vmatpush.msra.mxu0 0.0
        %670 = vmatpush.msra.mxu0 %v650
        %671 = vmatpush.msra.mxu0 %v649
        %672 = vmatmul.f32.gmra.mxu0 %v654
        %v673 = vpop.f32.mrf.mxu0
        %v674 = vadd.f32 0.0, %v673
        %675 = vdwg.mxu0
        %676 = vset.pattern.permute.xlu0 1
        %677 = vperm.xlu0 %676, %v384
        %v678 = vpop.permute.xlu0 %677
        %v681 = vsel %vm652, %v674, 0
        %683 = vmatpush.msra.mxu0 0.0
        %684 = vmatpush.msra.mxu0 0.0
        %685 = vmatpush.msra.mxu0 0.0
        %686 = vmatpush.msra.mxu0 0.0
        %687 = vmatpush.msra.mxu0 0.0
        %688 = vmatpush.msra.mxu0 0.0
        %689 = vmatpush.msra.mxu0 0.0
        %690 = vmatpush.msra.mxu0 0.0
        %691 = vmatpush.msra.mxu0 0.0
        %692 = vmatpush.msra.mxu0 0.0
        %693 = vmatpush.msra.mxu0 0.0
        %694 = vmatpush.msra.mxu0 0.0
        %695 = vmatpush.msra.mxu0 0.0
        %696 = vmatpush.msra.mxu0 0.0
        %697 = vmatpush.msra.mxu0 %v535
        %698 = vmatpush.msra.mxu0 %v532
        %699 = vmatmul.f32.gmra.mxu0 %v681
        %v700 = vpop.f32.mrf.mxu0
        %v701 = vadd.f32 %v678, %v700
        %702 = vdwg.mxu0
        %703 = vmatpush.msra.mxu0 0.0
        %704 = vmatpush.msra.mxu0 0.0
        %705 = vmatpush.msra.mxu0 0.0
        %706 = vmatpush.msra.mxu0 0.0
        %707 = vmatpush.msra.mxu0 0.0
        %708 = vmatpush.msra.mxu0 0.0
        %709 = vmatpush.msra.mxu0 0.0
        %710 = vmatpush.msra.mxu0 0.0
        %711 = vmatpush.msra.mxu0 0.0
        %712 = vmatpush.msra.mxu0 0.0
        %713 = vmatpush.msra.mxu0 0.0
        %714 = vmatpush.msra.mxu0 0.0
        %715 = vmatpush.msra.mxu0 0.0
        %716 = vmatpush.msra.mxu0 0.0
        %717 = vmatpush.msra.mxu0 %v536
        %718 = vmatpush.msra.mxu0 %v533
        %719 = vmatmul.f32.gmra.mxu0 %v681
        %v720 = vpop.f32.mrf.mxu0
        %v721 = vadd.f32 %v678, %v720
        %722 = vdwg.mxu0
        %723 = vmatpush.msra.mxu0 0.0
        %724 = vmatpush.msra.mxu0 0.0
        %725 = vmatpush.msra.mxu0 0.0
        %726 = vmatpush.msra.mxu0 0.0
        %727 = vmatpush.msra.mxu0 0.0
        %728 = vmatpush.msra.mxu0 0.0
        %729 = vmatpush.msra.mxu0 0.0
        %730 = vmatpush.msra.mxu0 0.0
        %731 = vmatpush.msra.mxu0 0.0
        %732 = vmatpush.msra.mxu0 0.0
        %733 = vmatpush.msra.mxu0 0.0
        %734 = vmatpush.msra.mxu0 0.0
        %735 = vmatpush.msra.mxu0 0.0
        %736 = vmatpush.msra.mxu0 0.0
        %737 = vmatpush.msra.mxu0 %v537
        %738 = vmatpush.msra.mxu0 %v534
        %739 = vmatmul.f32.gmra.mxu0 %v681
        %v740 = vpop.f32.mrf.mxu0
        %v741 = vadd.f32 %v678, %v740
        %742 = vdwg.mxu0
        %v743 = vmul.f32 %v701, %v526
        %v744 = vmul.f32 %v721, %v527
        %v745 = vmul.f32 %v741, %v528
        %746 = vst [vmem:[#allocation2 + $0x8] sm:$0xff] %v743
        %747 = vst [vmem:[#allocation2 + $0x10] sm:$0xff] %v744
        %748 = vst.msk [vmem:[#allocation2 + $0x18] sm:$0xff] %vm333, %v745
        %v749 = vld [vmem:[#allocation9 + $0x10] sm:$0xff]
        %v750 = vld [vmem:[#allocation2] sm:$0xff]
        %v751 = vld [vmem:[#allocation2 + $0x8] sm:$0xff]
        %v752 = vld [vmem:[#allocation2 + $0x10] sm:$0xff]
        %v753 = vld [vmem:[#allocation2 + $0x18] sm:$0xff]
        %758 = vrot.lane.b32.xlu0 %v750, 127
        %v759 = vpop.permute.xlu0 %758
        %760 = vrot.lane.b32.xlu0 %v751, 127
        %v761 = vpop.permute.xlu0 %760
        %762 = vrot.lane.b32.xlu0 %v752, 127
        %v763 = vpop.permute.xlu0 %762
        %764 = vrot.lane.b32.xlu0 %v753, 127
        %v765 = vpop.permute.xlu0 %764
        %vm766 = vcmask 1039360
        %v767 = vsel %vm766, %v759, %v761
        %v768 = vsel %vm766, %v761, %v763
        %v769 = vsel %vm766, %v763, %v765
        %770 = vrot.lane.b32.xlu0 %v750, 126
        %v771 = vpop.permute.xlu0 %770
        %772 = vrot.lane.b32.xlu0 %v751, 126
        %v773 = vpop.permute.xlu0 %772
        %774 = vrot.lane.b32.xlu0 %v752, 126
        %v775 = vpop.permute.xlu0 %774
        %776 = vrot.lane.b32.xlu0 %v753, 126
        %v777 = vpop.permute.xlu0 %776
        %vm778 = vcmask 1031168
        %v779 = vsel %vm778, %v771, %v773
        %v780 = vsel %vm778, %v773, %v775
        %v781 = vsel %vm778, %v775, %v777
        %782 = vrot.lane.b32.xlu0 %v750, 110
        %v783 = vpop.permute.xlu0 %782
        %784 = vrot.lane.b32.xlu0 %v751, 110
        %v785 = vpop.permute.xlu0 %784
        %786 = vrot.lane.b32.xlu0 %v752, 110
        %v787 = vpop.permute.xlu0 %786
        %788 = vrot.lane.b32.xlu0 %v753, 110
        %v789 = vpop.permute.xlu0 %788
        %v790 = vsel %vm363, %v783, %v785
        %v791 = vsel %vm363, %v785, %v787
        %v792 = vsel %vm363, %v787, %v789
        %793 = vrot.lane.b32.xlu0 %v751, 109
        %v794 = vpop.permute.xlu0 %793
        %795 = vrot.lane.b32.xlu0 %v752, 109
        %v796 = vpop.permute.xlu0 %795
        %797 = vrot.lane.b32.xlu0 %v753, 109
        %v798 = vpop.permute.xlu0 %797
        %v799 = vsel %vm372, %v794, %v796
        %v800 = vsel %vm372, %v796, %v798
        %801 = vrot.lane.b32.xlu0 %v751, 108
        %v802 = vpop.permute.xlu0 %801
        %803 = vrot.lane.b32.xlu0 %v752, 108
        %v804 = vpop.permute.xlu0 %803
        %805 = vrot.lane.b32.xlu0 %v753, 108
        %v806 = vpop.permute.xlu0 %805
        %vm807 = vcmask 883712
        %v808 = vsel %vm807, %v802, %v804
        %v809 = vsel %vm807, %v804, %v806
        %810 = vrot.lane.b32.xlu0 %v751, 92
        %v811 = vpop.permute.xlu0 %810
        %812 = vrot.lane.b32.xlu0 %v752, 92
        %v813 = vpop.permute.xlu0 %812
        %814 = vrot.lane.b32.xlu0 %v753, 92
        %v815 = vpop.permute.xlu0 %814
        %v816 = vsel %vm381, %v811, %v813
        %v817 = vsel %vm381, %v813, %v815
        %818 = vrot.lane.b32.xlu0 %v751, 91
        %v819 = vpop.permute.xlu0 %818
        %820 = vrot.lane.b32.xlu0 %v752, 91
        %v821 = vpop.permute.xlu0 %820
        %822 = vrot.lane.b32.xlu0 %v753, 91
        %v823 = vpop.permute.xlu0 %822
        %vm824 = vcmask 744448
        %v825 = vsel %vm824, %v819, %v821
        %v826 = vsel %vm824, %v821, %v823
        %827 = vrot.lane.b32.xlu0 %v751, 90
        %v828 = vpop.permute.xlu0 %827
        %829 = vrot.lane.b32.xlu0 %v752, 90
        %v830 = vpop.permute.xlu0 %829
        %831 = vrot.lane.b32.xlu0 %v753, 90
        %v832 = vpop.permute.xlu0 %831
        %vm833 = vcmask 736256
        %v834 = vsel %vm833, %v828, %v830
        %v835 = vsel %vm833, %v830, %v832
        %v836 = vld [vmem:[#allocation11] sm:$0xff]
        %838 = vset.pattern.permute.xlu0 2
        %839 = vperm.xlu0 %838, %v836
        %v840 = vpop.permute.xlu0 %839
        %842 = vrot.lane.b32.xlu0 %v750, 19
        %v843 = vpop.permute.xlu0 %842
        %844 = vrot.lane.b32.xlu0 %v751, 19
        %v845 = vpop.permute.xlu0 %844
        %846 = vrot.lane.b32.xlu0 %v752, 19
        %v847 = vpop.permute.xlu0 %846
        %848 = vrot.lane.b32.xlu0 %v753, 19
        %v849 = vpop.permute.xlu0 %848
        %850 = vrot.lane.b32.xlu0 %v767, 19
        %v851 = vpop.permute.xlu0 %850
        %852 = vrot.lane.b32.xlu0 %v768, 19
        %v853 = vpop.permute.xlu0 %852
        %854 = vrot.lane.b32.xlu0 %v769, 19
        %v855 = vpop.permute.xlu0 %854
        %856 = vrot.lane.b32.xlu0 %v765, 19
        %v857 = vpop.permute.xlu0 %856
        %858 = vrot.lane.b32.xlu0 %v779, 19
        %v859 = vpop.permute.xlu0 %858
        %860 = vrot.lane.b32.xlu0 %v780, 19
        %v861 = vpop.permute.xlu0 %860
        %862 = vrot.lane.b32.xlu0 %v781, 19
        %v863 = vpop.permute.xlu0 %862
        %864 = vrot.lane.b32.xlu0 %v777, 19
        %v865 = vpop.permute.xlu0 %864
        %866 = vrot.lane.b32.xlu0 %v790, 19
        %v867 = vpop.permute.xlu0 %866
        %868 = vrot.lane.b32.xlu0 %v791, 19
        %v869 = vpop.permute.xlu0 %868
        %870 = vrot.lane.b32.xlu0 %v792, 19
        %v871 = vpop.permute.xlu0 %870
        %872 = vrot.lane.b32.xlu0 %v789, 19
        %v873 = vpop.permute.xlu0 %872
        %874 = vrot.lane.b32.xlu0 %v794, 19
        %v875 = vpop.permute.xlu0 %874
        %876 = vrot.lane.b32.xlu0 %v799, 19
        %v877 = vpop.permute.xlu0 %876
        %878 = vrot.lane.b32.xlu0 %v800, 19
        %v879 = vpop.permute.xlu0 %878
        %880 = vrot.lane.b32.xlu0 %v798, 19
        %v881 = vpop.permute.xlu0 %880
        %882 = vrot.lane.b32.xlu0 %v802, 19
        %v883 = vpop.permute.xlu0 %882
        %884 = vrot.lane.b32.xlu0 %v808, 19
        %v885 = vpop.permute.xlu0 %884
        %886 = vrot.lane.b32.xlu0 %v809, 19
        %v887 = vpop.permute.xlu0 %886
        %888 = vrot.lane.b32.xlu0 %v806, 19
        %v889 = vpop.permute.xlu0 %888
        %890 = vrot.lane.b32.xlu0 %v811, 19
        %v891 = vpop.permute.xlu0 %890
        %892 = vrot.lane.b32.xlu0 %v816, 19
        %v893 = vpop.permute.xlu0 %892
        %894 = vrot.lane.b32.xlu0 %v817, 19
        %v895 = vpop.permute.xlu0 %894
        %896 = vrot.lane.b32.xlu0 %v815, 19
        %v897 = vpop.permute.xlu0 %896
        %898 = vrot.lane.b32.xlu0 %v819, 19
        %v899 = vpop.permute.xlu0 %898
        %900 = vrot.lane.b32.xlu0 %v825, 19
        %v901 = vpop.permute.xlu0 %900
        %902 = vrot.lane.b32.xlu0 %v826, 19
        %v903 = vpop.permute.xlu0 %902
        %904 = vrot.lane.b32.xlu0 %v823, 19
        %v905 = vpop.permute.xlu0 %904
        %906 = vrot.lane.b32.xlu0 %v828, 19
        %v907 = vpop.permute.xlu0 %906
        %908 = vrot.lane.b32.xlu0 %v834, 19
        %v909 = vpop.permute.xlu0 %908
        %910 = vrot.lane.b32.xlu0 %v835, 19
        %v911 = vpop.permute.xlu0 %910
        %912 = vrot.lane.b32.xlu0 %v832, 19
        %v913 = vpop.permute.xlu0 %912
        %vm914 = vcmask 154624
        %v915 = vsel %vm914, %v843, %v845
        %v916 = vsel %vm914, %v845, %v847
        %v917 = vsel %vm914, %v847, %v849
        %v918 = vsel %vm914, %v851, %v853
        %v919 = vsel %vm914, %v853, %v855
        %v920 = vsel %vm914, %v855, %v857
        %v921 = vsel %vm914, %v859, %v861
        %v922 = vsel %vm914, %v861, %v863
        %v923 = vsel %vm914, %v863, %v865
        %v924 = vsel %vm914, %v867, %v869
        %v925 = vsel %vm914, %v869, %v871
        %v926 = vsel %vm914, %v871, %v873
        %v927 = vsel %vm914, %v875, %v877
        %v928 = vsel %vm914, %v877, %v879
        %v929 = vsel %vm914, %v879, %v881
        %v930 = vsel %vm914, %v883, %v885
        %v931 = vsel %vm914, %v885, %v887
        %v932 = vsel %vm914, %v887, %v889
        %v933 = vsel %vm914, %v891, %v893
        %v934 = vsel %vm914, %v893, %v895
        %v935 = vsel %vm914, %v895, %v897
        %v936 = vsel %vm914, %v899, %v901
        %v937 = vsel %vm914, %v901, %v903
        %v938 = vsel %vm914, %v903, %v905
        %v939 = vsel %vm914, %v907, %v909
        %v940 = vsel %vm914, %v909, %v911
        %v941 = vsel %vm914, %v911, %v913
        %vm969 = vcmask 588800
        %v971 = vsel %vm969, %v749, 0
        %973 = vmatpush.msra.mxu0 0.0
        %974 = vmatpush.msra.mxu0 0.0
        %975 = vmatpush.msra.mxu0 0.0
        %976 = vmatpush.msra.mxu0 0.0
        %977 = vmatpush.msra.mxu0 0.0
        %978 = vmatpush.msra.mxu0 0.0
        %979 = vmatpush.msra.mxu0 0.0
        %980 = vmatpush.msra.mxu0 %v939
        %981 = vmatpush.msra.mxu0 %v936
        %982 = vmatpush.msra.mxu0 %v933
        %983 = vmatpush.msra.mxu0 %v930
        %984 = vmatpush.msra.mxu0 %v927
        %985 = vmatpush.msra.mxu0 %v924
        %986 = vmatpush.msra.mxu0 %v921
        %987 = vmatpush.msra.mxu0 %v918
        %988 = vmatpush.msra.mxu0 %v915
        %989 = vmatmul.f32.gmra.mxu0 %v971
        %v990 = vpop.f32.mrf.mxu0
        %v991 = vadd.f32 %v840, %v990
        %992 = vdwg.mxu0
        %993 = vmatpush.msra.mxu0 0.0
        %994 = vmatpush.msra.mxu0 0.0
        %995 = vmatpush.msra.mxu0 0.0
        %996 = vmatpush.msra.mxu0 0.0
        %997 = vmatpush.msra.mxu0 0.0
        %998 = vmatpush.msra.mxu0 0.0
        %999 = vmatpush.msra.mxu0 0.0
        %1000 = vmatpush.msra.mxu0 %v940
        %1001 = vmatpush.msra.mxu0 %v937
        %1002 = vmatpush.msra.mxu0 %v934
        %1003 = vmatpush.msra.mxu0 %v931
        %1004 = vmatpush.msra.mxu0 %v928
        %1005 = vmatpush.msra.mxu0 %v925
        %1006 = vmatpush.msra.mxu0 %v922
        %1007 = vmatpush.msra.mxu0 %v919
        %1008 = vmatpush.msra.mxu0 %v916
        %1009 = vmatmul.f32.gmra.mxu0 %v971
        %v1010 = vpop.f32.mrf.mxu0
        %v1011 = vadd.f32 %v840, %v1010
        %1012 = vdwg.mxu0
        %1013 = vmatpush.msra.mxu0 0.0
        %1014 = vmatpush.msra.mxu0 0.0
        %1015 = vmatpush.msra.mxu0 0.0
        %1016 = vmatpush.msra.mxu0 0.0
        %1017 = vmatpush.msra.mxu0 0.0
        %1018 = vmatpush.msra.mxu0 0.0
        %1019 = vmatpush.msra.mxu0 0.0
        %1020 = vmatpush.msra.mxu0 %v941
        %1021 = vmatpush.msra.mxu0 %v938
        %1022 = vmatpush.msra.mxu0 %v935
        %1023 = vmatpush.msra.mxu0 %v932
        %1024 = vmatpush.msra.mxu0 %v929
        %1025 = vmatpush.msra.mxu0 %v926
        %1026 = vmatpush.msra.mxu0 %v923
        %1027 = vmatpush.msra.mxu0 %v920
        %1028 = vmatpush.msra.mxu0 %v917
        %1029 = vmatmul.f32.gmra.mxu0 %v971
        %v1030 = vpop.f32.mrf.mxu0
        %v1031 = vadd.f32 %v840, %v1030
        %1032 = vdwg.mxu0
        %v1033 = vmax.f32 %v991, 0.0
        %v1034 = vmax.f32 %v1011, 0.0
        %v1035 = vmax.f32 %v1031, 0.0
        %v1036 = vmul.f32 %v1033, %v526
        %v1037 = vmul.f32 %v1034, %v527
        %v1038 = vmul.f32 %v1035, %v528
        %1039 = vst [vmem:[#allocation2 + $0x8] sm:$0xff] %v1036
        %1040 = vst [vmem:[#allocation2 + $0x10] sm:$0xff] %v1037
        %1041 = vst.msk [vmem:[#allocation2 + $0x18] sm:$0xff] %vm333, %v1038
        %v1042 = vld [vmem:[#allocation9 + $0x18] sm:$0xff]
        %v1043 = vld [vmem:[#allocation2] sm:$0xff]
        %v1044 = vld [vmem:[#allocation2 + $0x8] sm:$0xff]
        %v1045 = vld [vmem:[#allocation2 + $0x10] sm:$0xff]
        %v1046 = vld [vmem:[#allocation2 + $0x18] sm:$0xff]
        %1051 = vrot.lane.b32.xlu0 %v1043, 127
        %v1052 = vpop.permute.xlu0 %1051
        %1053 = vrot.lane.b32.xlu0 %v1044, 127
        %v1054 = vpop.permute.xlu0 %1053
        %1055 = vrot.lane.b32.xlu0 %v1045, 127
        %v1056 = vpop.permute.xlu0 %1055
        %1057 = vrot.lane.b32.xlu0 %v1046, 127
        %v1058 = vpop.permute.xlu0 %1057
        %v1059 = vsel %vm766, %v1052, %v1054
        %v1060 = vsel %vm766, %v1054, %v1056
        %v1061 = vsel %vm766, %v1056, %v1058
        %1062 = vrot.lane.b32.xlu0 %v1043, 126
        %v1063 = vpop.permute.xlu0 %1062
        %1064 = vrot.lane.b32.xlu0 %v1044, 126
        %v1065 = vpop.permute.xlu0 %1064
        %1066 = vrot.lane.b32.xlu0 %v1045, 126
        %v1067 = vpop.permute.xlu0 %1066
        %1068 = vrot.lane.b32.xlu0 %v1046, 126
        %v1069 = vpop.permute.xlu0 %1068
        %v1070 = vsel %vm778, %v1063, %v1065
        %v1071 = vsel %vm778, %v1065, %v1067
        %v1072 = vsel %vm778, %v1067, %v1069
        %1073 = vrot.lane.b32.xlu0 %v1043, 110
        %v1074 = vpop.permute.xlu0 %1073
        %1075 = vrot.lane.b32.xlu0 %v1044, 110
        %v1076 = vpop.permute.xlu0 %1075
        %1077 = vrot.lane.b32.xlu0 %v1045, 110
        %v1078 = vpop.permute.xlu0 %1077
        %1079 = vrot.lane.b32.xlu0 %v1046, 110
        %v1080 = vpop.permute.xlu0 %1079
        %v1081 = vsel %vm363, %v1074, %v1076
        %v1082 = vsel %vm363, %v1076, %v1078
        %v1083 = vsel %vm363, %v1078, %v1080
        %1084 = vrot.lane.b32.xlu0 %v1044, 109
        %v1085 = vpop.permute.xlu0 %1084
        %1086 = vrot.lane.b32.xlu0 %v1045, 109
        %v1087 = vpop.permute.xlu0 %1086
        %1088 = vrot.lane.b32.xlu0 %v1046, 109
        %v1089 = vpop.permute.xlu0 %1088
        %v1090 = vsel %vm372, %v1085, %v1087
        %v1091 = vsel %vm372, %v1087, %v1089
        %1092 = vrot.lane.b32.xlu0 %v1044, 108
        %v1093 = vpop.permute.xlu0 %1092
        %1094 = vrot.lane.b32.xlu0 %v1045, 108
        %v1095 = vpop.permute.xlu0 %1094
        %1096 = vrot.lane.b32.xlu0 %v1046, 108
        %v1097 = vpop.permute.xlu0 %1096
        %v1098 = vsel %vm807, %v1093, %v1095
        %v1099 = vsel %vm807, %v1095, %v1097
        %1100 = vrot.lane.b32.xlu0 %v1044, 92
        %v1101 = vpop.permute.xlu0 %1100
        %1102 = vrot.lane.b32.xlu0 %v1045, 92
        %v1103 = vpop.permute.xlu0 %1102
        %1104 = vrot.lane.b32.xlu0 %v1046, 92
        %v1105 = vpop.permute.xlu0 %1104
        %v1106 = vsel %vm381, %v1101, %v1103
        %v1107 = vsel %vm381, %v1103, %v1105
        %1108 = vrot.lane.b32.xlu0 %v1044, 91
        %v1109 = vpop.permute.xlu0 %1108
        %1110 = vrot.lane.b32.xlu0 %v1045, 91
        %v1111 = vpop.permute.xlu0 %1110
        %1112 = vrot.lane.b32.xlu0 %v1046, 91
        %v1113 = vpop.permute.xlu0 %1112
        %v1114 = vsel %vm824, %v1109, %v1111
        %v1115 = vsel %vm824, %v1111, %v1113
        %1116 = vrot.lane.b32.xlu0 %v1044, 90
        %v1117 = vpop.permute.xlu0 %1116
        %1118 = vrot.lane.b32.xlu0 %v1045, 90
        %v1119 = vpop.permute.xlu0 %1118
        %1120 = vrot.lane.b32.xlu0 %v1046, 90
        %v1121 = vpop.permute.xlu0 %1120
        %v1122 = vsel %vm833, %v1117, %v1119
        %v1123 = vsel %vm833, %v1119, %v1121
        %v1124 = vld [vmem:[#allocation11] sm:$0xff]
        %1126 = vset.pattern.permute.xlu0 3
        %1127 = vperm.xlu0 %1126, %v1124
        %v1128 = vpop.permute.xlu0 %1127
        %1130 = vrot.lane.b32.xlu0 %v1043, 19
        %v1131 = vpop.permute.xlu0 %1130
        %1132 = vrot.lane.b32.xlu0 %v1044, 19
        %v1133 = vpop.permute.xlu0 %1132
        %1134 = vrot.lane.b32.xlu0 %v1045, 19
        %v1135 = vpop.permute.xlu0 %1134
        %1136 = vrot.lane.b32.xlu0 %v1046, 19
        %v1137 = vpop.permute.xlu0 %1136
        %1138 = vrot.lane.b32.xlu0 %v1059, 19
        %v1139 = vpop.permute.xlu0 %1138
        %1140 = vrot.lane.b32.xlu0 %v1060, 19
        %v1141 = vpop.permute.xlu0 %1140
        %1142 = vrot.lane.b32.xlu0 %v1061, 19
        %v1143 = vpop.permute.xlu0 %1142
        %1144 = vrot.lane.b32.xlu0 %v1058, 19
        %v1145 = vpop.permute.xlu0 %1144
        %1146 = vrot.lane.b32.xlu0 %v1070, 19
        %v1147 = vpop.permute.xlu0 %1146
        %1148 = vrot.lane.b32.xlu0 %v1071, 19
        %v1149 = vpop.permute.xlu0 %1148
        %1150 = vrot.lane.b32.xlu0 %v1072, 19
        %v1151 = vpop.permute.xlu0 %1150
        %1152 = vrot.lane.b32.xlu0 %v1069, 19
        %v1153 = vpop.permute.xlu0 %1152
        %1154 = vrot.lane.b32.xlu0 %v1081, 19
        %v1155 = vpop.permute.xlu0 %1154
        %1156 = vrot.lane.b32.xlu0 %v1082, 19
        %v1157 = vpop.permute.xlu0 %1156
        %1158 = vrot.lane.b32.xlu0 %v1083, 19
        %v1159 = vpop.permute.xlu0 %1158
        %1160 = vrot.lane.b32.xlu0 %v1080, 19
        %v1161 = vpop.permute.xlu0 %1160
        %1162 = vrot.lane.b32.xlu0 %v1085, 19
        %v1163 = vpop.permute.xlu0 %1162
        %1164 = vrot.lane.b32.xlu0 %v1090, 19
        %v1165 = vpop.permute.xlu0 %1164
        %1166 = vrot.lane.b32.xlu0 %v1091, 19
        %v1167 = vpop.permute.xlu0 %1166
        %1168 = vrot.lane.b32.xlu0 %v1089, 19
        %v1169 = vpop.permute.xlu0 %1168
        %1170 = vrot.lane.b32.xlu0 %v1093, 19
        %v1171 = vpop.permute.xlu0 %1170
        %1172 = vrot.lane.b32.xlu0 %v1098, 19
        %v1173 = vpop.permute.xlu0 %1172
        %1174 = vrot.lane.b32.xlu0 %v1099, 19
        %v1175 = vpop.permute.xlu0 %1174
        %1176 = vrot.lane.b32.xlu0 %v1097, 19
        %v1177 = vpop.permute.xlu0 %1176
        %1178 = vrot.lane.b32.xlu0 %v1101, 19
        %v1179 = vpop.permute.xlu0 %1178
        %1180 = vrot.lane.b32.xlu0 %v1106, 19
        %v1181 = vpop.permute.xlu0 %1180
        %1182 = vrot.lane.b32.xlu0 %v1107, 19
        %v1183 = vpop.permute.xlu0 %1182
        %1184 = vrot.lane.b32.xlu0 %v1105, 19
        %v1185 = vpop.permute.xlu0 %1184
        %1186 = vrot.lane.b32.xlu0 %v1109, 19
        %v1187 = vpop.permute.xlu0 %1186
        %1188 = vrot.lane.b32.xlu0 %v1114, 19
        %v1189 = vpop.permute.xlu0 %1188
        %1190 = vrot.lane.b32.xlu0 %v1115, 19
        %v1191 = vpop.permute.xlu0 %1190
        %1192 = vrot.lane.b32.xlu0 %v1113, 19
        %v1193 = vpop.permute.xlu0 %1192
        %1194 = vrot.lane.b32.xlu0 %v1117, 19
        %v1195 = vpop.permute.xlu0 %1194
        %1196 = vrot.lane.b32.xlu0 %v1122, 19
        %v1197 = vpop.permute.xlu0 %1196
        %1198 = vrot.lane.b32.xlu0 %v1123, 19
        %v1199 = vpop.permute.xlu0 %1198
        %1200 = vrot.lane.b32.xlu0 %v1121, 19
        %v1201 = vpop.permute.xlu0 %1200
        %v1202 = vsel %vm914, %v1131, %v1133
        %v1203 = vsel %vm914, %v1133, %v1135
        %v1204 = vsel %vm914, %v1135, %v1137
        %v1205 = vsel %vm914, %v1139, %v1141
        %v1206 = vsel %vm914, %v1141, %v1143
        %v1207 = vsel %vm914, %v1143, %v1145
        %v1208 = vsel %vm914, %v1147, %v1149
        %v1209 = vsel %vm914, %v1149, %v1151
        %v1210 = vsel %vm914, %v1151, %v1153
        %v1211 = vsel %vm914, %v1155, %v1157
        %v1212 = vsel %vm914, %v1157, %v1159
        %v1213 = vsel %vm914, %v1159, %v1161
        %v1214 = vsel %vm914, %v1163, %v1165
        %v1215 = vsel %vm914, %v1165, %v1167
        %v1216 = vsel %vm914, %v1167, %v1169
        %v1217 = vsel %vm914, %v1171, %v1173
        %v1218 = vsel %vm914, %v1173, %v1175
        %v1219 = vsel %vm914, %v1175, %v1177
        %v1220 = vsel %vm914, %v1179, %v1181
        %v1221 = vsel %vm914, %v1181, %v1183
        %v1222 = vsel %vm914, %v1183, %v1185
        %v1223 = vsel %vm914, %v1187, %v1189
        %v1224 = vsel %vm914, %v1189, %v1191
        %v1225 = vsel %vm914, %v1191, %v1193
        %v1226 = vsel %vm914, %v1195, %v1197
        %v1227 = vsel %vm914, %v1197, %v1199
        %v1228 = vsel %vm914, %v1199, %v1201
        %v1257 = vsel %vm969, %v1042, 0
        %1259 = vmatpush.msra.mxu0 0.0
        %1260 = vmatpush.msra.mxu0 0.0
        %1261 = vmatpush.msra.mxu0 0.0
        %1262 = vmatpush.msra.mxu0 0.0
        %1263 = vmatpush.msra.mxu0 0.0
        %1264 = vmatpush.msra.mxu0 0.0
        %1265 = vmatpush.msra.mxu0 0.0
        %1266 = vmatpush.msra.mxu0 %v1226
        %1267 = vmatpush.msra.mxu0 %v1223
        %1268 = vmatpush.msra.mxu0 %v1220
        %1269 = vmatpush.msra.mxu0 %v1217
        %1270 = vmatpush.msra.mxu0 %v1214
        %1271 = vmatpush.msra.mxu0 %v1211
        %1272 = vmatpush.msra.mxu0 %v1208
        %1273 = vmatpush.msra.mxu0 %v1205
        %1274 = vmatpush.msra.mxu0 %v1202
        %1275 = vmatmul.f32.gmra.mxu0 %v1257
        %v1276 = vpop.f32.mrf.mxu0
        %v1277 = vadd.f32 %v1128, %v1276
        %1278 = vdwg.mxu0
        %1279 = vmatpush.msra.mxu0 0.0
        %1280 = vmatpush.msra.mxu0 0.0
        %1281 = vmatpush.msra.mxu0 0.0
        %1282 = vmatpush.msra.mxu0 0.0
        %1283 = vmatpush.msra.mxu0 0.0
        %1284 = vmatpush.msra.mxu0 0.0
        %1285 = vmatpush.msra.mxu0 0.0
        %1286 = vmatpush.msra.mxu0 %v1227
        %1287 = vmatpush.msra.mxu0 %v1224
        %1288 = vmatpush.msra.mxu0 %v1221
        %1289 = vmatpush.msra.mxu0 %v1218
        %1290 = vmatpush.msra.mxu0 %v1215
        %1291 = vmatpush.msra.mxu0 %v1212
        %1292 = vmatpush.msra.mxu0 %v1209
        %1293 = vmatpush.msra.mxu0 %v1206
        %1294 = vmatpush.msra.mxu0 %v1203
        %1295 = vmatmul.f32.gmra.mxu0 %v1257
        %v1296 = vpop.f32.mrf.mxu0
        %v1297 = vadd.f32 %v1128, %v1296
        %1298 = vdwg.mxu0
        %1299 = vmatpush.msra.mxu0 0.0
        %1300 = vmatpush.msra.mxu0 0.0
        %1301 = vmatpush.msra.mxu0 0.0
        %1302 = vmatpush.msra.mxu0 0.0
        %1303 = vmatpush.msra.mxu0 0.0
        %1304 = vmatpush.msra.mxu0 0.0
        %1305 = vmatpush.msra.mxu0 0.0
        %1306 = vmatpush.msra.mxu0 %v1228
        %1307 = vmatpush.msra.mxu0 %v1225
        %1308 = vmatpush.msra.mxu0 %v1222
        %1309 = vmatpush.msra.mxu0 %v1219
        %1310 = vmatpush.msra.mxu0 %v1216
        %1311 = vmatpush.msra.mxu0 %v1213
        %1312 = vmatpush.msra.mxu0 %v1210
        %1313 = vmatpush.msra.mxu0 %v1207
        %1314 = vmatpush.msra.mxu0 %v1204
        %1315 = vmatmul.f32.gmra.mxu0 %v1257
        %v1316 = vpop.f32.mrf.mxu0
        %v1317 = vadd.f32 %v1128, %v1316
        %1318 = vdwg.mxu0
        %v1319 = vld [vmem:[%s272 + $0x8] sm:$0xff]
        %v1320 = vld [vmem:[%s272 + $0x10] sm:$0xff]
        %v1321 = vld [vmem:[%s272 + $0x18] sm:$0xff]
        %v1322 = vadd.f32 %v1277, %v1319
        %v1323 = vadd.f32 %v1297, %v1320
        %v1324 = vadd.f32 %v1317, %v1321
        %1325 = vst [vmem:[%s329] sm:$0xff] %v1322
        %1326 = vst [vmem:[%s329 + $0x8] sm:$0xff] %v1323
        %1327 = vst.msk [vmem:[%s329 + $0x10] sm:$0xff] %vm333, %v1324
        %s1328 = sand.u32 %s149, 1
        %s1329 = scalar_lea.sflag [#allocation5], %s1328
        %s1330 = sand.u32 %s149, 1
        %s1331 = smul.addr %s1330, 24
        %s1332 = scalar_lea.vmem [#allocation12], %s1331
        // Predicated region
        $region61: #{tpu_custom_call.1} parent=39 // pred_check
          %p1333 = pneg %p159
        $region62: #{tpu_custom_call.1} parent=39 // pred_check_branch
          %1335 = sbr.rel (%p1333) target = $region64
        $region63: #{tpu_custom_call.1} parent=39 // pred_region
          %1337 = vsyncadd %s1329, 0
          %s1338 = smul.addr %s26, 3
          %s1339 = smul.addr %s1338, 8
          %s1340 = scalar_lea.hbm %s5, %s1339
          %s1342 = sshll.u32 %s1332, 4
          %s1343 = int_to_ptr.vmem [resolvable:$true] %s1342
          %s1344 = sshll.u32 %s1340, 4
          %s1345 = int_to_ptr.hbm [resolvable:$true] %s1344
          %1347 = dma.vmem_to_hbm [thread:$0]  %s1343, 384, %s1345, %s1329
        $region64: #{tpu_custom_call.1} parent=39 // pred_fallthru
          _
      $region40: #{tpu_custom_call.1} parent=5 // pred_fallthru
        _
      %p1348 = scmp.le.s32.totalorder 2, %s21
      // Predicated region
      $region65: #{tpu_custom_call.1} parent=5 // pred_check
        %p1349 = pneg %p1348
      $region66: #{tpu_custom_call.1} parent=5 // pred_check_branch
        %1351 = sbr.rel (%p1349) target = $region68
      $region67: #{tpu_custom_call.1} parent=5 // pred_region
        %s1352 = ssub.s32 %s21, 2
        // Predicated region
        $region69: #{tpu_custom_call.1} parent=67 // pred_check
          %p1353 = pneg %p165
        $region70: #{tpu_custom_call.1} parent=67 // pred_check_branch
          %1355 = sbr.rel (%p1353) target = $region72
        $region71: #{tpu_custom_call.1} parent=67 // pred_region
          %s1356 = sand.u32 %s150, 1
          %s1357 = scalar_lea.sflag [#allocation5], %s1356
          %s1358 = sand.u32 %s150, 1
          %s1359 = smul.addr %s1358, 24
          %s1360 = scalar_lea.vmem [#allocation12], %s1359
          %1362 = dma.done %s1357, 384
        $region72: #{tpu_custom_call.1} parent=67 // pred_fallthru
          _
      $region68: #{tpu_custom_call.1} parent=5 // pred_fallthru
        _
    $region6: #{tpu_custom_call.1} parent=1 // loop_footer
      %s25 = sadd.s32 1, %s21
    $region7: #{tpu_custom_call.1} parent=1 // loop_footer_branch
      %20 = sbr.rel target = $region3
    $region8: #{tpu_custom_call.1} parent=1 // loop_exit
      _
    %1363 = vsyncpa [#allocation4], 1
    %s1364 = scalar_lea.sflag [#allocation4], 1
    %1365 = vsyncpa %s1364, 1
    %1366 = vsyncpa [#allocation7], 1
    %s1367 = scalar_lea.sflag [#allocation7], 1
    %1368 = vsyncpa %s1367, 1
    %1369 = vsyncpa [#allocation10], 1
    %1370 = vsyncpa [#allocation5], 1
    %s1371 = scalar_lea.sflag [#allocation5], 1
    %1372 = vsyncpa %s1371, 1

</llo_original>
